<compile_context>
chip_gen: v7x
topology: tpu7x:2x2x1
jax: 0.10.0
libtpu: 0.0.40
codegen_flags: <defaults>
</compile_context>

<pallas_src>
import functools
import math

import numpy as np
import jax
import jax.numpy as jnp
from jax.experimental import pallas as pl
from jax.experimental.pallas import tpu as pltpu

_MIB = 1024 * 1024


# ----------------------------------------------------------------------------
# Module constants (faithful copies of the PyTorch helpers)
# ----------------------------------------------------------------------------
def get_freq_indices(method):
    assert method in ['top1', 'top2', 'top4', 'top8', 'top16', 'top32',
                      'bot1', 'bot2', 'bot4', 'bot8', 'bot16', 'bot32',
                      'low1', 'low2', 'low4', 'low8', 'low16', 'low32']
    num_freq = int(method[3:])
    if 'top' in method:
        all_x = [0, 0, 6, 0, 0, 1, 1, 4, 5, 1, 3, 0, 0, 0, 3, 2,
                 4, 6, 3, 5, 5, 2, 6, 5, 5, 3, 3, 4, 2, 2, 6, 1]
        all_y = [0, 1, 0, 5, 2, 0, 2, 0, 0, 6, 0, 4, 6, 3, 5, 2,
                 6, 3, 3, 3, 5, 1, 1, 2, 4, 2, 1, 1, 3, 0, 5, 3]
    elif 'low' in method:
        all_x = [0, 0, 1, 1, 0, 2, 2, 1, 2, 0, 3, 4, 0, 1, 3, 0,
                 1, 2, 3, 4, 5, 0, 1, 2, 3, 4, 5, 6, 1, 2, 3, 4]
        all_y = [0, 1, 0, 1, 2, 0, 1, 2, 2, 3, 0, 0, 4, 3, 1, 5,
                 4, 3, 2, 1, 0, 6, 5, 4, 3, 2, 1, 0, 6, 5, 4, 3]
    else:  # 'bot'
        all_x = [6, 1, 3, 3, 2, 4, 1, 2, 4, 4, 5, 1, 4, 6, 2, 5,
                 6, 1, 6, 2, 2, 4, 3, 3, 5, 5, 6, 2, 5, 5, 3, 6]
        all_y = [6, 4, 4, 6, 6, 3, 1, 4, 4, 5, 6, 5, 2, 2, 5, 1,
                 4, 3, 5, 0, 3, 1, 1, 2, 4, 2, 1, 1, 5, 3, 3, 3]
    return all_x[:num_freq], all_y[:num_freq]


def _build_filter(pos, freq, POS):
    result = math.cos(math.pi * freq * (pos + 0.5) / POS) / math.sqrt(POS)
    return result if freq == 0 else result * math.sqrt(2)


def _make_dct_filters(dct_h, dct_w, mapper_x, mapper_y, channels):
    """(F, C, dct_h, dct_w) filter bank matching the registered dct_weight buffers."""
    num_freq = len(mapper_x)
    filt = np.zeros((num_freq, channels, dct_h, dct_w), dtype=np.float32)
    for f in range(num_freq):
        for tx in range(dct_h):
            for ty in range(dct_w):
                filt[f, :, tx, ty] = (_build_filter(tx, mapper_x[f], dct_h) *
                                      _build_filter(ty, mapper_y[f], dct_w))
    return jnp.asarray(filt)


def _adaptive_pool_matrix(in_size, out_size):
    """(out_size, in_size) row-stochastic matrix with torch adaptive_avg_pool2d bins."""
    m = np.zeros((out_size, in_size), dtype=np.float32)
    for i in range(out_size):
        start = (i * in_size) // out_size
        end = -((-(i + 1) * in_size) // out_size)  # ceil
        m[i, start:end] = 1.0 / (end - start)
    return jnp.asarray(m)


# ----------------------------------------------------------------------------
# Small chip-aware helpers
# ----------------------------------------------------------------------------
def _round_up(v, m):
    return -(-v // m) * m


def _vmem_capacity_bytes():
    try:
        info = pltpu.get_tpu_info()
        for name in ("vmem_capacity_bytes", "vmem_bytes", "vmem_size_bytes"):
            v = getattr(info, name, None)
            if v:
                return int(v)
    except Exception:
        pass
    return 64 * _MIB  # conservative fallback (v7x has the smallest VMEM)


def _is_v5e():
    try:
        kind = jax.devices()[0].device_kind.lower()
        return ("v5e" in kind) or ("v5 lite" in kind) or ("v5lite" in kind)
    except Exception:
        return False


def _choose_batch_tile(B, C, num_freq, s_pad, cap):
    """Batch elements per gate grid step: as many as fit half the VMEM budget."""
    budget = max(8 * _MIB, cap // 2)
    fixed = 2 * num_freq * C * s_pad * 4          # double-buffered DCT bank
    per_b = 6 * C * s_pad * 4                     # xp (2 bufs) + working temps
    tb = 1 if budget <= fixed else (budget - fixed) // per_b
    return int(max(1, min(B, 16, tb)))


def _choose_scale_tiles(C, HW, itemsize, block_cap):
    """(tc, thw): lane-dense spatial tiles, channel tiling only for huge C."""
    if C * HW * itemsize <= block_cap:
        return C, HW
    lanes = (block_cap // max(1, C * itemsize)) // 128 * 128
    if lanes >= 128:
        return C, int(min(lanes, _round_up(HW, 128)))
    # C so large that even a 128-lane full-C slab busts the cap: tile channels too.
    thw = HW if HW < 128 else 128
    tc = int(min(C, max(8, (block_cap // max(1, thw * itemsize)) // 8 * 8)))
    return tc, thw


# ----------------------------------------------------------------------------
# Pallas kernels
# ----------------------------------------------------------------------------
def _mfca_gate_kernel(xp_ref, dct_ref, w1_ref, w2_ref, att_ref, *, num_freq, s_valid):
    """Batched gate: multi-spectral weighting, 3 spatial pools, fc, sigmoid.

    xp_ref : (TB, C, S_PAD) f32  pooled input, zero-padded on lanes and batch
    dct_ref: (F,  C, S_PAD) f32  DCT filter bank, zero-padded on lanes
    w1_ref : (Cr, C)        f32  Conv2d(C, C//r, 1, bias=False) weight
    w2_ref : (C, Cr)        f32  Conv2d(C//r, C, 1, bias=False) weight
    att_ref: (TB, C, 1)     f32  sigmoid gate (output)
    """
    xp = xp_ref[...]
    tb, c, s_pad = xp.shape

    # Explicit lane mask: padded lanes must never win the max/min reductions.
    lane = jax.lax.broadcasted_iota(jnp.int32, (tb, c, s_pad), 2)
    valid = lane < s_valid

    avg = jnp.zeros((tb, c, 1), jnp.float32)
    mx = jnp.zeros((tb, c, 1), jnp.float32)
    mn = jnp.zeros((tb, c, 1), jnp.float32)
    for f in range(num_freq):                        # static unroll, F is small
        spec = xp * dct_ref[f]                       # (TB, C, S_PAD); pads are 0*0
        avg = avg + jnp.sum(spec, axis=-1, keepdims=True)
        mx = mx + jnp.max(jnp.where(valid, spec, -jnp.inf), axis=-1, keepdims=True)
        mn = mn + jnp.min(jnp.where(valid, spec, jnp.inf), axis=-1, keepdims=True)
    inv_f = 1.0 / num_freq
    avg = avg * (inv_f / s_valid)                    # sum -> mean over the S real lanes
    mx = mx * inv_f
    mn = mn * inv_f

    # Pooled features as columns with C on sublanes: (C, 3*TB), pool-major order.
    cols = []
    for pooled in (avg, mx, mn):
        for b in range(tb):
            cols.append(pooled[b])                   # (C, 1)
    feat = jnp.concatenate(cols, axis=-1)            # (C, 3*TB)

    # fc (no bias) on every pooled column at once -> wide MXU matmul.
    h = jnp.maximum(jnp.dot(w1_ref[...], feat,
                            preferred_element_type=jnp.float32), 0.0)    # (Cr, 3*TB)
    maps = jnp.dot(w2_ref[...], h, preferred_element_type=jnp.float32)   # (C, 3*TB)
    att = jax.nn.sigmoid(maps[:, 0:tb] + maps[:, tb:2 * tb] + maps[:, 2 * tb:3 * tb])
    for b in range(tb):
        att_ref[b] = att[:, b:b + 1]                 # (C, 1) gate per batch element


def _mfca_scale_kernel(att_ref, x_ref, o_ref, *, compute_f32):
    """out = x * gate for one (TC, THW) spatial tile of one batch element."""
    x = x_ref[...]
    if compute_f32:
        # f32 input, or v5e (no bf16 VALU): multiply in f32.
        o_ref[...] = (x.astype(jnp.float32) * att_ref[...]).astype(o_ref.dtype)
    else:
        # bf16/low-precision input on v6e/v7x: multiply natively, cast gate once.
        o_ref[...] = x * att_ref[...].astype(x.dtype)


# ----------------------------------------------------------------------------
# Wrapper
# ----------------------------------------------------------------------------
def multi_frequency_channel_attention(x, dct_filters, w1, w2, *,
                                      dct_h=7, dct_w=7,
                                      batch_tile=None, scale_tiles=None):
    """x: (B, C, H, W). dct_filters: (F, C, dct_h, dct_w).
    w1: (Cr, C) = Conv2d(C, C//r, 1, bias=False) weight; w2: (C, Cr)."""
    B, C, H, W = x.shape
    Fq = dct_filters.shape[0]
    Cr = w1.shape[0]
    S = dct_h * dct_w
    S_PAD = _round_up(S, 128)
    HW = H * W
    itemsize = jnp.dtype(x.dtype).itemsize
    cap = _vmem_capacity_bytes()

    # -- tiny adaptive average pool to (dct_h, dct_w): exact PyTorch bins -----
    # x stays in its native dtype; the contraction upcasts in-flight (no
    # full-size f32 copy of x is materialized).
    # TODO(synk): fuse as a Pallas reduce pass if the extra HBM read of x matters.
    if (H, W) == (dct_h, dct_w):
        xp = x.reshape(B, C, S).astype(jnp.float32)
    else:
        ph = _adaptive_pool_matrix(H, dct_h)
        pw = _adaptive_pool_matrix(W, dct_w)
        xp = jnp.einsum('iH,bcHW,jW->bcij', ph, x, pw,
                        precision=jax.lax.Precision.HIGHEST,
                        preferred_element_type=jnp.float32).reshape(B, C, S)

    # -- gate kernel: batched channel attention from the pooled slab ----------
    tb = batch_tile if batch_tile is not None else _choose_batch_tile(B, C, Fq, S_PAD, cap)
    tb = int(max(1, min(tb, B)))
    b_pad = _round_up(B, tb)

    xp = jnp.pad(xp, ((0, b_pad - B), (0, 0), (0, S_PAD - S)))         # zero pads
    dct = jnp.pad(dct_filters.reshape(Fq, C, S).astype(jnp.float32),
                  ((0, 0), (0, 0), (0, S_PAD - S)))
    w1f = w1.astype(jnp.float32)
    w2f = w2.astype(jnp.float32)

    gate_need = (4 * (2 * tb * C * S_PAD + 2 * Fq * C * S_PAD + 4 * Cr * C + 2 * tb * C)
                 + 6 * tb * C * S_PAD * 4 + 2 * _MIB)
    gate_vmem = int(min(int(cap * 0.75), max(gate_need, 32 * _MIB)))

    att = pl.pallas_call(
        functools.partial(_mfca_gate_kernel, num_freq=Fq, s_valid=S),
        out_shape=jax.ShapeDtypeStruct((b_pad, C, 1), jnp.float32),
        grid=(b_pad // tb,),
        in_specs=[
            pl.BlockSpec((tb, C, S_PAD), lambda bt: (bt, 0, 0)),
            pl.BlockSpec((Fq, C, S_PAD), lambda bt: (0, 0, 0)),
            pl.BlockSpec((Cr, C), lambda bt: (0, 0)),
            pl.BlockSpec((C, Cr), lambda bt: (0, 0)),
        ],
        out_specs=pl.BlockSpec((tb, C, 1), lambda bt: (bt, 0, 0)),
        compiler_params=pltpu.CompilerParams(
            dimension_semantics=("parallel",),
            vmem_limit_bytes=gate_vmem),
    )(xp, dct, w1f, w2f)

    # -- scale kernel: out = x * gate, tiled over (C, HW) ---------------------
    block_cap = max(2 * _MIB, cap // 8)            # ~8 MiB on v7x, ~16 MiB on v5e/v6e
    if scale_tiles is not None:
        tc, thw = scale_tiles
    else:
        tc, thw = _choose_scale_tiles(C, HW, itemsize, block_cap)
        # v7x megacore balance: avoid a 1-block grid when the work is splittable.
        if B * pl.cdiv(C, tc) * pl.cdiv(HW, thw) < 2 and HW >= 256:
            thw = _round_up(pl.cdiv(HW, 2), 128)

    compute_f32 = (x.dtype == jnp.float32) or _is_v5e()
    scale_vmem = int(min(int(cap * 0.75),
                         max(4 * tc * thw * itemsize + 4 * _MIB, 32 * _MIB)))

    x_flat = x.reshape(B, C, HW)                   # native dtype, streamed from HBM
    out = pl.pallas_call(
        functools.partial(_mfca_scale_kernel, compute_f32=compute_f32),
        out_shape=jax.ShapeDtypeStruct((B, C, HW), x.dtype),
        grid=(B, pl.cdiv(C, tc), pl.cdiv(HW, thw)),
        in_specs=[
            pl.BlockSpec((None, tc, 1), lambda b, c, t: (b, c, 0)),
            pl.BlockSpec((None, tc, thw), lambda b, c, t: (b, c, t)),
        ],
        out_specs=pl.BlockSpec((None, tc, thw), lambda b, c, t: (b, c, t)),
        compiler_params=pltpu.CompilerParams(
            dimension_semantics=("parallel", "parallel", "parallel"),
            vmem_limit_bytes=scale_vmem),
        cost_estimate=pl.CostEstimate(
            flops=B * C * HW,
            transcendentals=0,
            bytes_accessed=2 * B * C * HW * itemsize + B * C * 4),
    )(att, x_flat)

    return out.reshape(B, C, H, W)


# ----------------------------------------------------------------------------
# Pure-JAX reference matching the PyTorch module
# ----------------------------------------------------------------------------
def mfca_ref(x, dct_filters, w1, w2, dct_h=7, dct_w=7):
    B, C, H, W = x.shape
    if (H, W) == (dct_h, dct_w):
        xp = x.astype(jnp.float32)
    else:
        ph = _adaptive_pool_matrix(H, dct_h)
        pw = _adaptive_pool_matrix(W, dct_w)
        xp = jnp.einsum('iH,bcHW,jW->bcij', ph, x, pw,
                        precision=jax.lax.Precision.HIGHEST,
                        preferred_element_type=jnp.float32)
    s = xp[:, None] * dct_filters[None].astype(jnp.float32)        # (B, F, C, dh, dw)
    avg = jnp.mean(s, axis=(-2, -1)).mean(axis=1)                   # (B, C)
    mx = jnp.max(s, axis=(-2, -1)).mean(axis=1)
    mn = jnp.min(s, axis=(-2, -1)).mean(axis=1)

    w1f = w1.astype(jnp.float32)
    w2f = w2.astype(jnp.float32)

    def fc(v):
        h = jnp.maximum(jnp.matmul(v, w1f.T, precision=jax.lax.Precision.HIGHEST), 0.0)
        return jnp.matmul(h, w2f.T, precision=jax.lax.Precision.HIGHEST)

    att = jax.nn.sigmoid(fc(avg) + fc(mx) + fc(mn))                 # (B, C)
    return (x.astype(jnp.float32) * att[:, :, None, None]).astype(x.dtype)


# ----------------------------------------------------------------------------
if __name__ == "__main__":
    B, C, H, W = 2, 32, 16, 16
    dct_h = dct_w = 7
    frequency_branches = 16
    reduction = 16
    Cr = C // reduction

    mapper_x, mapper_y = get_freq_indices("top%d" % frequency_branches)
    mapper_x = [v * (dct_h // 7) for v in mapper_x]
    mapper_y = [v * (dct_w // 7) for v in mapper_y]
    dct_filters = _make_dct_filters(dct_h, dct_w, mapper_x, mapper_y, C)   # (16, C, 7, 7)

    key = jax.random.PRNGKey(0)
    kx, kw1, kw2, kx2, kx3, kx4 = jax.random.split(key, 6)
    w1 = jax.random.normal(kw1, (Cr, C), dtype=jnp.float32) * 0.2   # Conv2d(C, C//r, 1, bias=False)
    w2 = jax.random.normal(kw2, (C, Cr), dtype=jnp.float32) * 0.2   # Conv2d(C//r, C, 1, bias=False)

    def check(xin, atol, rtol, **kw):
        out = jax.block_until_ready(multi_frequency_channel_attention(
            xin, dct_filters, w1, w2, dct_h=dct_h, dct_w=dct_w, **kw))
        ref = jax.block_until_ready(mfca_ref(xin, dct_filters, w1, w2, dct_h, dct_w))
        assert out.shape == xin.shape and out.dtype == xin.dtype
        diff = jnp.max(jnp.abs(out.astype(jnp.float32) - ref.astype(jnp.float32)))
        assert jnp.allclose(out.astype(jnp.float32), ref.astype(jnp.float32),
                            atol=atol, rtol=rtol), float(diff)

    # 1) basic square image
    x1 = jax.random.normal(kx, (B, C, H, W), dtype=jnp.float32)
    check(x1, 2e-4, 2e-4)

    # 2) non-square image with a ragged spatial tile (HW=240, thw=128)
    x2 = jax.random.normal(kx2, (B, C, 12, 20), dtype=jnp.float32)
    check(x2, 2e-4, 2e-4, scale_tiles=(C, 128))

    # 3) all-negative input: would expose zero-padded lanes leaking into the
    #    max pool; also exercises gate batch tiling with padding (B=3, TB=2).
    x3 = -jnp.abs(jax.random.normal(kx3, (3, C, H, W), dtype=jnp.float32)) - 0.5
    check(x3, 2e-4, 2e-4, batch_tile=2)

    # 4) all-positive input: would expose zero-padded lanes leaking into the min pool.
    x4 = jnp.abs(jax.random.normal(kx4, (B, C, H, W), dtype=jnp.float32)) + 0.5
    check(x4, 2e-4, 2e-4)

    # 5) bf16 streaming path (native-dtype multiply on v6e/v7x, f32 on v5e).
    x5 = x1.astype(jnp.bfloat16)
    check(x5, 5e-2, 5e-2)

    print("KERNEL_OK")
</pallas_src>

<mosaic_0001>
module attributes {stable_mosaic.version = 11 : i64} {
  func.func @_mfca_gate_kernel(%arg0: i32, %arg1: memref<2x32x128xf32, #tpu.memory_space<vmem>>, %arg2: memref<16x32x128xf32, #tpu.memory_space<vmem>>, %arg3: memref<2x32xf32, #tpu.memory_space<vmem>>, %arg4: memref<32x2xf32, #tpu.memory_space<vmem>>, %arg5: memref<2x32x1xf32, #tpu.memory_space<vmem>>) attributes {dimension_semantics = [#tpu.dimension_semantics<parallel>], iteration_bounds = array<i64: 1>, scalar_prefetch = 0 : i64, scratch_operands = 0 : i64, tpu.core_type = #tpu.core_type<tc>, window_params = [{transform_indices = @transform_0, window_bounds = array<i64: 2, 32, 128>}, {pipeline_mode = #tpu.pipeline_mode<synchronous>, transform_indices = @transform_1, window_bounds = array<i64: 16, 32, 128>}, {pipeline_mode = #tpu.pipeline_mode<synchronous>, transform_indices = @transform_2, window_bounds = array<i64: 2, 32>}, {pipeline_mode = #tpu.pipeline_mode<synchronous>, transform_indices = @transform_3, window_bounds = array<i64: 32, 2>}, {transform_indices = @transform_4, window_bounds = array<i64: 2, 32, 1>}]} {
    %c0 = arith.constant 0 : index
    %c0_0 = arith.constant 0 : index
    %c0_1 = arith.constant 0 : index
    %0 = vector.load %arg1[%c0, %c0_0, %c0_1] : memref<2x32x128xf32, #tpu.memory_space<vmem>>, vector<2x32x128xf32>
    %1 = tpu.iota {dimensions = array<i32: 2>} : vector<2x32x128xi32>
    %c49_i32 = arith.constant 49 : i32
    %2 = vector.broadcast %c49_i32 : i32 to vector<2x32x128xi32>
    %3 = arith.cmpi slt, %1, %2 : vector<2x32x128xi32>
    %cst = arith.constant 0.000000e+00 : f32
    %4 = vector.broadcast %cst : f32 to vector<2x32x1xf32>
    %cst_2 = arith.constant 0.000000e+00 : f32
    %5 = vector.broadcast %cst_2 : f32 to vector<2x32x1xf32>
    %cst_3 = arith.constant 0.000000e+00 : f32
    %6 = vector.broadcast %cst_3 : f32 to vector<2x32x1xf32>
    %c0_4 = arith.constant 0 : index
    %c0_5 = arith.constant 0 : index
    %c0_6 = arith.constant 0 : index
    %7 = vector.load %arg2[%c0_4, %c0_5, %c0_6] : memref<16x32x128xf32, #tpu.memory_space<vmem>>, vector<1x32x128xf32>
    %8 = vector.shape_cast %7 : vector<1x32x128xf32> to vector<32x128xf32>
    %9 = vector.shape_cast %8 : vector<32x128xf32> to vector<1x32x128xf32>
    %10 = vector.broadcast %9 : vector<1x32x128xf32> to vector<2x32x128xf32>
    %11 = arith.mulf %0, %10 : vector<2x32x128xf32>
    %cst_7 = arith.constant dense<0.000000e+00> : vector<2x32xf32>
    %12 = vector.multi_reduction <add>, %11, %cst_7 [2] : vector<2x32x128xf32> to vector<2x32xf32>
    %13 = vector.shape_cast %12 : vector<2x32xf32> to vector<2x32x1xf32>
    %14 = arith.addf %4, %13 : vector<2x32x1xf32>
    %cst_8 = arith.constant 0xFF800000 : f32
    %15 = vector.broadcast %cst_8 : f32 to vector<2x32x128xf32>
    %16 = arith.select %3, %11, %15 : vector<2x32x128xi1>, vector<2x32x128xf32>
    %cst_9 = arith.constant dense<0xFF800000> : vector<2x32xf32>
    %17 = vector.multi_reduction <maximumf>, %16, %cst_9 [2] : vector<2x32x128xf32> to vector<2x32xf32>
    %18 = vector.shape_cast %17 : vector<2x32xf32> to vector<2x32x1xf32>
    %19 = arith.addf %5, %18 : vector<2x32x1xf32>
    %cst_10 = arith.constant 0x7F800000 : f32
    %20 = vector.broadcast %cst_10 : f32 to vector<2x32x128xf32>
    %21 = arith.select %3, %11, %20 : vector<2x32x128xi1>, vector<2x32x128xf32>
    %cst_11 = arith.constant dense<0x7F800000> : vector<2x32xf32>
    %22 = vector.multi_reduction <minimumf>, %21, %cst_11 [2] : vector<2x32x128xf32> to vector<2x32xf32>
    %23 = vector.shape_cast %22 : vector<2x32xf32> to vector<2x32x1xf32>
    %24 = arith.addf %6, %23 : vector<2x32x1xf32>
    %c1 = arith.constant 1 : index
    %c0_12 = arith.constant 0 : index
    %c0_13 = arith.constant 0 : index
    %25 = vector.load %arg2[%c1, %c0_12, %c0_13] : memref<16x32x128xf32, #tpu.memory_space<vmem>>, vector<1x32x128xf32>
    %26 = vector.shape_cast %25 : vector<1x32x128xf32> to vector<32x128xf32>
    %27 = vector.shape_cast %26 : vector<32x128xf32> to vector<1x32x128xf32>
    %28 = vector.broadcast %27 : vector<1x32x128xf32> to vector<2x32x128xf32>
    %29 = arith.mulf %0, %28 : vector<2x32x128xf32>
    %cst_14 = arith.constant dense<0.000000e+00> : vector<2x32xf32>
    %30 = vector.multi_reduction <add>, %29, %cst_14 [2] : vector<2x32x128xf32> to vector<2x32xf32>
    %31 = vector.shape_cast %30 : vector<2x32xf32> to vector<2x32x1xf32>
    %32 = arith.addf %14, %31 : vector<2x32x1xf32>
    %cst_15 = arith.constant 0xFF800000 : f32
    %33 = vector.broadcast %cst_15 : f32 to vector<2x32x128xf32>
    %34 = arith.select %3, %29, %33 : vector<2x32x128xi1>, vector<2x32x128xf32>
    %cst_16 = arith.constant dense<0xFF800000> : vector<2x32xf32>
    %35 = vector.multi_reduction <maximumf>, %34, %cst_16 [2] : vector<2x32x128xf32> to vector<2x32xf32>
    %36 = vector.shape_cast %35 : vector<2x32xf32> to vector<2x32x1xf32>
    %37 = arith.addf %19, %36 : vector<2x32x1xf32>
    %cst_17 = arith.constant 0x7F800000 : f32
    %38 = vector.broadcast %cst_17 : f32 to vector<2x32x128xf32>
    %39 = arith.select %3, %29, %38 : vector<2x32x128xi1>, vector<2x32x128xf32>
    %cst_18 = arith.constant dense<0x7F800000> : vector<2x32xf32>
    %40 = vector.multi_reduction <minimumf>, %39, %cst_18 [2] : vector<2x32x128xf32> to vector<2x32xf32>
    %41 = vector.shape_cast %40 : vector<2x32xf32> to vector<2x32x1xf32>
    %42 = arith.addf %24, %41 : vector<2x32x1xf32>
    %c2 = arith.constant 2 : index
    %c0_19 = arith.constant 0 : index
    %c0_20 = arith.constant 0 : index
    %43 = vector.load %arg2[%c2, %c0_19, %c0_20] : memref<16x32x128xf32, #tpu.memory_space<vmem>>, vector<1x32x128xf32>
    %44 = vector.shape_cast %43 : vector<1x32x128xf32> to vector<32x128xf32>
    %45 = vector.shape_cast %44 : vector<32x128xf32> to vector<1x32x128xf32>
    %46 = vector.broadcast %45 : vector<1x32x128xf32> to vector<2x32x128xf32>
    %47 = arith.mulf %0, %46 : vector<2x32x128xf32>
    %cst_21 = arith.constant dense<0.000000e+00> : vector<2x32xf32>
    %48 = vector.multi_reduction <add>, %47, %cst_21 [2] : vector<2x32x128xf32> to vector<2x32xf32>
    %49 = vector.shape_cast %48 : vector<2x32xf32> to vector<2x32x1xf32>
    %50 = arith.addf %32, %49 : vector<2x32x1xf32>
    %cst_22 = arith.constant 0xFF800000 : f32
    %51 = vector.broadcast %cst_22 : f32 to vector<2x32x128xf32>
    %52 = arith.select %3, %47, %51 : vector<2x32x128xi1>, vector<2x32x128xf32>
    %cst_23 = arith.constant dense<0xFF800000> : vector<2x32xf32>
    %53 = vector.multi_reduction <maximumf>, %52, %cst_23 [2] : vector<2x32x128xf32> to vector<2x32xf32>
    %54 = vector.shape_cast %53 : vector<2x32xf32> to vector<2x32x1xf32>
    %55 = arith.addf %37, %54 : vector<2x32x1xf32>
    %cst_24 = arith.constant 0x7F800000 : f32
    %56 = vector.broadcast %cst_24 : f32 to vector<2x32x128xf32>
    %57 = arith.select %3, %47, %56 : vector<2x32x128xi1>, vector<2x32x128xf32>
    %cst_25 = arith.constant dense<0x7F800000> : vector<2x32xf32>
    %58 = vector.multi_reduction <minimumf>, %57, %cst_25 [2] : vector<2x32x128xf32> to vector<2x32xf32>
    %59 = vector.shape_cast %58 : vector<2x32xf32> to vector<2x32x1xf32>
    %60 = arith.addf %42, %59 : vector<2x32x1xf32>
    %c3 = arith.constant 3 : index
    %c0_26 = arith.constant 0 : index
    %c0_27 = arith.constant 0 : index
    %61 = vector.load %arg2[%c3, %c0_26, %c0_27] : memref<16x32x128xf32, #tpu.memory_space<vmem>>, vector<1x32x128xf32>
    %62 = vector.shape_cast %61 : vector<1x32x128xf32> to vector<32x128xf32>
    %63 = vector.shape_cast %62 : vector<32x128xf32> to vector<1x32x128xf32>
    %64 = vector.broadcast %63 : vector<1x32x128xf32> to vector<2x32x128xf32>
    %65 = arith.mulf %0, %64 : vector<2x32x128xf32>
    %cst_28 = arith.constant dense<0.000000e+00> : vector<2x32xf32>
    %66 = vector.multi_reduction <add>, %65, %cst_28 [2] : vector<2x32x128xf32> to vector<2x32xf32>
    %67 = vector.shape_cast %66 : vector<2x32xf32> to vector<2x32x1xf32>
    %68 = arith.addf %50, %67 : vector<2x32x1xf32>
    %cst_29 = arith.constant 0xFF800000 : f32
    %69 = vector.broadcast %cst_29 : f32 to vector<2x32x128xf32>
    %70 = arith.select %3, %65, %69 : vector<2x32x128xi1>, vector<2x32x128xf32>
    %cst_30 = arith.constant dense<0xFF800000> : vector<2x32xf32>
    %71 = vector.multi_reduction <maximumf>, %70, %cst_30 [2] : vector<2x32x128xf32> to vector<2x32xf32>
    %72 = vector.shape_cast %71 : vector<2x32xf32> to vector<2x32x1xf32>
    %73 = arith.addf %55, %72 : vector<2x32x1xf32>
    %cst_31 = arith.constant 0x7F800000 : f32
    %74 = vector.broadcast %cst_31 : f32 to vector<2x32x128xf32>
    %75 = arith.select %3, %65, %74 : vector<2x32x128xi1>, vector<2x32x128xf32>
    %cst_32 = arith.constant dense<0x7F800000> : vector<2x32xf32>
    %76 = vector.multi_reduction <minimumf>, %75, %cst_32 [2] : vector<2x32x128xf32> to vector<2x32xf32>
    %77 = vector.shape_cast %76 : vector<2x32xf32> to vector<2x32x1xf32>
    %78 = arith.addf %60, %77 : vector<2x32x1xf32>
    %c4 = arith.constant 4 : index
    %c0_33 = arith.constant 0 : index
    %c0_34 = arith.constant 0 : index
    %79 = vector.load %arg2[%c4, %c0_33, %c0_34] : memref<16x32x128xf32, #tpu.memory_space<vmem>>, vector<1x32x128xf32>
    %80 = vector.shape_cast %79 : vector<1x32x128xf32> to vector<32x128xf32>
    %81 = vector.shape_cast %80 : vector<32x128xf32> to vector<1x32x128xf32>
    %82 = vector.broadcast %81 : vector<1x32x128xf32> to vector<2x32x128xf32>
    %83 = arith.mulf %0, %82 : vector<2x32x128xf32>
    %cst_35 = arith.constant dense<0.000000e+00> : vector<2x32xf32>
    %84 = vector.multi_reduction <add>, %83, %cst_35 [2] : vector<2x32x128xf32> to vector<2x32xf32>
    %85 = vector.shape_cast %84 : vector<2x32xf32> to vector<2x32x1xf32>
    %86 = arith.addf %68, %85 : vector<2x32x1xf32>
    %cst_36 = arith.constant 0xFF800000 : f32
    %87 = vector.broadcast %cst_36 : f32 to vector<2x32x128xf32>
    %88 = arith.select %3, %83, %87 : vector<2x32x128xi1>, vector<2x32x128xf32>
    %cst_37 = arith.constant dense<0xFF800000> : vector<2x32xf32>
    %89 = vector.multi_reduction <maximumf>, %88, %cst_37 [2] : vector<2x32x128xf32> to vector<2x32xf32>
    %90 = vector.shape_cast %89 : vector<2x32xf32> to vector<2x32x1xf32>
    %91 = arith.addf %73, %90 : vector<2x32x1xf32>
    %cst_38 = arith.constant 0x7F800000 : f32
    %92 = vector.broadcast %cst_38 : f32 to vector<2x32x128xf32>
    %93 = arith.select %3, %83, %92 : vector<2x32x128xi1>, vector<2x32x128xf32>
    %cst_39 = arith.constant dense<0x7F800000> : vector<2x32xf32>
    %94 = vector.multi_reduction <minimumf>, %93, %cst_39 [2] : vector<2x32x128xf32> to vector<2x32xf32>
    %95 = vector.shape_cast %94 : vector<2x32xf32> to vector<2x32x1xf32>
    %96 = arith.addf %78, %95 : vector<2x32x1xf32>
    %c5 = arith.constant 5 : index
    %c0_40 = arith.constant 0 : index
    %c0_41 = arith.constant 0 : index
    %97 = vector.load %arg2[%c5, %c0_40, %c0_41] : memref<16x32x128xf32, #tpu.memory_space<vmem>>, vector<1x32x128xf32>
    %98 = vector.shape_cast %97 : vector<1x32x128xf32> to vector<32x128xf32>
    %99 = vector.shape_cast %98 : vector<32x128xf32> to vector<1x32x128xf32>
    %100 = vector.broadcast %99 : vector<1x32x128xf32> to vector<2x32x128xf32>
    %101 = arith.mulf %0, %100 : vector<2x32x128xf32>
    %cst_42 = arith.constant dense<0.000000e+00> : vector<2x32xf32>
    %102 = vector.multi_reduction <add>, %101, %cst_42 [2] : vector<2x32x128xf32> to vector<2x32xf32>
    %103 = vector.shape_cast %102 : vector<2x32xf32> to vector<2x32x1xf32>
    %104 = arith.addf %86, %103 : vector<2x32x1xf32>
    %cst_43 = arith.constant 0xFF800000 : f32
    %105 = vector.broadcast %cst_43 : f32 to vector<2x32x128xf32>
    %106 = arith.select %3, %101, %105 : vector<2x32x128xi1>, vector<2x32x128xf32>
    %cst_44 = arith.constant dense<0xFF800000> : vector<2x32xf32>
    %107 = vector.multi_reduction <maximumf>, %106, %cst_44 [2] : vector<2x32x128xf32> to vector<2x32xf32>
    %108 = vector.shape_cast %107 : vector<2x32xf32> to vector<2x32x1xf32>
    %109 = arith.addf %91, %108 : vector<2x32x1xf32>
    %cst_45 = arith.constant 0x7F800000 : f32
    %110 = vector.broadcast %cst_45 : f32 to vector<2x32x128xf32>
    %111 = arith.select %3, %101, %110 : vector<2x32x128xi1>, vector<2x32x128xf32>
    %cst_46 = arith.constant dense<0x7F800000> : vector<2x32xf32>
    %112 = vector.multi_reduction <minimumf>, %111, %cst_46 [2] : vector<2x32x128xf32> to vector<2x32xf32>
    %113 = vector.shape_cast %112 : vector<2x32xf32> to vector<2x32x1xf32>
    %114 = arith.addf %96, %113 : vector<2x32x1xf32>
    %c6 = arith.constant 6 : index
    %c0_47 = arith.constant 0 : index
    %c0_48 = arith.constant 0 : index
    %115 = vector.load %arg2[%c6, %c0_47, %c0_48] : memref<16x32x128xf32, #tpu.memory_space<vmem>>, vector<1x32x128xf32>
    %116 = vector.shape_cast %115 : vector<1x32x128xf32> to vector<32x128xf32>
    %117 = vector.shape_cast %116 : vector<32x128xf32> to vector<1x32x128xf32>
    %118 = vector.broadcast %117 : vector<1x32x128xf32> to vector<2x32x128xf32>
    %119 = arith.mulf %0, %118 : vector<2x32x128xf32>
    %cst_49 = arith.constant dense<0.000000e+00> : vector<2x32xf32>
    %120 = vector.multi_reduction <add>, %119, %cst_49 [2] : vector<2x32x128xf32> to vector<2x32xf32>
    %121 = vector.shape_cast %120 : vector<2x32xf32> to vector<2x32x1xf32>
    %122 = arith.addf %104, %121 : vector<2x32x1xf32>
    %cst_50 = arith.constant 0xFF800000 : f32
    %123 = vector.broadcast %cst_50 : f32 to vector<2x32x128xf32>
    %124 = arith.select %3, %119, %123 : vector<2x32x128xi1>, vector<2x32x128xf32>
    %cst_51 = arith.constant dense<0xFF800000> : vector<2x32xf32>
    %125 = vector.multi_reduction <maximumf>, %124, %cst_51 [2] : vector<2x32x128xf32> to vector<2x32xf32>
    %126 = vector.shape_cast %125 : vector<2x32xf32> to vector<2x32x1xf32>
    %127 = arith.addf %109, %126 : vector<2x32x1xf32>
    %cst_52 = arith.constant 0x7F800000 : f32
    %128 = vector.broadcast %cst_52 : f32 to vector<2x32x128xf32>
    %129 = arith.select %3, %119, %128 : vector<2x32x128xi1>, vector<2x32x128xf32>
    %cst_53 = arith.constant dense<0x7F800000> : vector<2x32xf32>
    %130 = vector.multi_reduction <minimumf>, %129, %cst_53 [2] : vector<2x32x128xf32> to vector<2x32xf32>
    %131 = vector.shape_cast %130 : vector<2x32xf32> to vector<2x32x1xf32>
    %132 = arith.addf %114, %131 : vector<2x32x1xf32>
    %c7 = arith.constant 7 : index
    %c0_54 = arith.constant 0 : index
    %c0_55 = arith.constant 0 : index
    %133 = vector.load %arg2[%c7, %c0_54, %c0_55] : memref<16x32x128xf32, #tpu.memory_space<vmem>>, vector<1x32x128xf32>
    %134 = vector.shape_cast %133 : vector<1x32x128xf32> to vector<32x128xf32>
    %135 = vector.shape_cast %134 : vector<32x128xf32> to vector<1x32x128xf32>
    %136 = vector.broadcast %135 : vector<1x32x128xf32> to vector<2x32x128xf32>
    %137 = arith.mulf %0, %136 : vector<2x32x128xf32>
    %cst_56 = arith.constant dense<0.000000e+00> : vector<2x32xf32>
    %138 = vector.multi_reduction <add>, %137, %cst_56 [2] : vector<2x32x128xf32> to vector<2x32xf32>
    %139 = vector.shape_cast %138 : vector<2x32xf32> to vector<2x32x1xf32>
    %140 = arith.addf %122, %139 : vector<2x32x1xf32>
    %cst_57 = arith.constant 0xFF800000 : f32
    %141 = vector.broadcast %cst_57 : f32 to vector<2x32x128xf32>
    %142 = arith.select %3, %137, %141 : vector<2x32x128xi1>, vector<2x32x128xf32>
    %cst_58 = arith.constant dense<0xFF800000> : vector<2x32xf32>
    %143 = vector.multi_reduction <maximumf>, %142, %cst_58 [2] : vector<2x32x128xf32> to vector<2x32xf32>
    %144 = vector.shape_cast %143 : vector<2x32xf32> to vector<2x32x1xf32>
    %145 = arith.addf %127, %144 : vector<2x32x1xf32>
    %cst_59 = arith.constant 0x7F800000 : f32
    %146 = vector.broadcast %cst_59 : f32 to vector<2x32x128xf32>
    %147 = arith.select %3, %137, %146 : vector<2x32x128xi1>, vector<2x32x128xf32>
    %cst_60 = arith.constant dense<0x7F800000> : vector<2x32xf32>
    %148 = vector.multi_reduction <minimumf>, %147, %cst_60 [2] : vector<2x32x128xf32> to vector<2x32xf32>
    %149 = vector.shape_cast %148 : vector<2x32xf32> to vector<2x32x1xf32>
    %150 = arith.addf %132, %149 : vector<2x32x1xf32>
    %c8 = arith.constant 8 : index
    %c0_61 = arith.constant 0 : index
    %c0_62 = arith.constant 0 : index
    %151 = vector.load %arg2[%c8, %c0_61, %c0_62] : memref<16x32x128xf32, #tpu.memory_space<vmem>>, vector<1x32x128xf32>
    %152 = vector.shape_cast %151 : vector<1x32x128xf32> to vector<32x128xf32>
    %153 = vector.shape_cast %152 : vector<32x128xf32> to vector<1x32x128xf32>
    %154 = vector.broadcast %153 : vector<1x32x128xf32> to vector<2x32x128xf32>
    %155 = arith.mulf %0, %154 : vector<2x32x128xf32>
    %cst_63 = arith.constant dense<0.000000e+00> : vector<2x32xf32>
    %156 = vector.multi_reduction <add>, %155, %cst_63 [2] : vector<2x32x128xf32> to vector<2x32xf32>
    %157 = vector.shape_cast %156 : vector<2x32xf32> to vector<2x32x1xf32>
    %158 = arith.addf %140, %157 : vector<2x32x1xf32>
    %cst_64 = arith.constant 0xFF800000 : f32
    %159 = vector.broadcast %cst_64 : f32 to vector<2x32x128xf32>
    %160 = arith.select %3, %155, %159 : vector<2x32x128xi1>, vector<2x32x128xf32>
    %cst_65 = arith.constant dense<0xFF800000> : vector<2x32xf32>
    %161 = vector.multi_reduction <maximumf>, %160, %cst_65 [2] : vector<2x32x128xf32> to vector<2x32xf32>
    %162 = vector.shape_cast %161 : vector<2x32xf32> to vector<2x32x1xf32>
    %163 = arith.addf %145, %162 : vector<2x32x1xf32>
    %cst_66 = arith.constant 0x7F800000 : f32
    %164 = vector.broadcast %cst_66 : f32 to vector<2x32x128xf32>
    %165 = arith.select %3, %155, %164 : vector<2x32x128xi1>, vector<2x32x128xf32>
    %cst_67 = arith.constant dense<0x7F800000> : vector<2x32xf32>
    %166 = vector.multi_reduction <minimumf>, %165, %cst_67 [2] : vector<2x32x128xf32> to vector<2x32xf32>
    %167 = vector.shape_cast %166 : vector<2x32xf32> to vector<2x32x1xf32>
    %168 = arith.addf %150, %167 : vector<2x32x1xf32>
    %c9 = arith.constant 9 : index
    %c0_68 = arith.constant 0 : index
    %c0_69 = arith.constant 0 : index
    %169 = vector.load %arg2[%c9, %c0_68, %c0_69] : memref<16x32x128xf32, #tpu.memory_space<vmem>>, vector<1x32x128xf32>
    %170 = vector.shape_cast %169 : vector<1x32x128xf32> to vector<32x128xf32>
    %171 = vector.shape_cast %170 : vector<32x128xf32> to vector<1x32x128xf32>
    %172 = vector.broadcast %171 : vector<1x32x128xf32> to vector<2x32x128xf32>
    %173 = arith.mulf %0, %172 : vector<2x32x128xf32>
    %cst_70 = arith.constant dense<0.000000e+00> : vector<2x32xf32>
    %174 = vector.multi_reduction <add>, %173, %cst_70 [2] : vector<2x32x128xf32> to vector<2x32xf32>
    %175 = vector.shape_cast %174 : vector<2x32xf32> to vector<2x32x1xf32>
    %176 = arith.addf %158, %175 : vector<2x32x1xf32>
    %cst_71 = arith.constant 0xFF800000 : f32
    %177 = vector.broadcast %cst_71 : f32 to vector<2x32x128xf32>
    %178 = arith.select %3, %173, %177 : vector<2x32x128xi1>, vector<2x32x128xf32>
    %cst_72 = arith.constant dense<0xFF800000> : vector<2x32xf32>
    %179 = vector.multi_reduction <maximumf>, %178, %cst_72 [2] : vector<2x32x128xf32> to vector<2x32xf32>
    %180 = vector.shape_cast %179 : vector<2x32xf32> to vector<2x32x1xf32>
    %181 = arith.addf %163, %180 : vector<2x32x1xf32>
    %cst_73 = arith.constant 0x7F800000 : f32
    %182 = vector.broadcast %cst_73 : f32 to vector<2x32x128xf32>
    %183 = arith.select %3, %173, %182 : vector<2x32x128xi1>, vector<2x32x128xf32>
    %cst_74 = arith.constant dense<0x7F800000> : vector<2x32xf32>
    %184 = vector.multi_reduction <minimumf>, %183, %cst_74 [2] : vector<2x32x128xf32> to vector<2x32xf32>
    %185 = vector.shape_cast %184 : vector<2x32xf32> to vector<2x32x1xf32>
    %186 = arith.addf %168, %185 : vector<2x32x1xf32>
    %c10 = arith.constant 10 : index
    %c0_75 = arith.constant 0 : index
    %c0_76 = arith.constant 0 : index
    %187 = vector.load %arg2[%c10, %c0_75, %c0_76] : memref<16x32x128xf32, #tpu.memory_space<vmem>>, vector<1x32x128xf32>
    %188 = vector.shape_cast %187 : vector<1x32x128xf32> to vector<32x128xf32>
    %189 = vector.shape_cast %188 : vector<32x128xf32> to vector<1x32x128xf32>
    %190 = vector.broadcast %189 : vector<1x32x128xf32> to vector<2x32x128xf32>
    %191 = arith.mulf %0, %190 : vector<2x32x128xf32>
    %cst_77 = arith.constant dense<0.000000e+00> : vector<2x32xf32>
    %192 = vector.multi_reduction <add>, %191, %cst_77 [2] : vector<2x32x128xf32> to vector<2x32xf32>
    %193 = vector.shape_cast %192 : vector<2x32xf32> to vector<2x32x1xf32>
    %194 = arith.addf %176, %193 : vector<2x32x1xf32>
    %cst_78 = arith.constant 0xFF800000 : f32
    %195 = vector.broadcast %cst_78 : f32 to vector<2x32x128xf32>
    %196 = arith.select %3, %191, %195 : vector<2x32x128xi1>, vector<2x32x128xf32>
    %cst_79 = arith.constant dense<0xFF800000> : vector<2x32xf32>
    %197 = vector.multi_reduction <maximumf>, %196, %cst_79 [2] : vector<2x32x128xf32> to vector<2x32xf32>
    %198 = vector.shape_cast %197 : vector<2x32xf32> to vector<2x32x1xf32>
    %199 = arith.addf %181, %198 : vector<2x32x1xf32>
    %cst_80 = arith.constant 0x7F800000 : f32
    %200 = vector.broadcast %cst_80 : f32 to vector<2x32x128xf32>
    %201 = arith.select %3, %191, %200 : vector<2x32x128xi1>, vector<2x32x128xf32>
    %cst_81 = arith.constant dense<0x7F800000> : vector<2x32xf32>
    %202 = vector.multi_reduction <minimumf>, %201, %cst_81 [2] : vector<2x32x128xf32> to vector<2x32xf32>
    %203 = vector.shape_cast %202 : vector<2x32xf32> to vector<2x32x1xf32>
    %204 = arith.addf %186, %203 : vector<2x32x1xf32>
    %c11 = arith.constant 11 : index
    %c0_82 = arith.constant 0 : index
    %c0_83 = arith.constant 0 : index
    %205 = vector.load %arg2[%c11, %c0_82, %c0_83] : memref<16x32x128xf32, #tpu.memory_space<vmem>>, vector<1x32x128xf32>
    %206 = vector.shape_cast %205 : vector<1x32x128xf32> to vector<32x128xf32>
    %207 = vector.shape_cast %206 : vector<32x128xf32> to vector<1x32x128xf32>
    %208 = vector.broadcast %207 : vector<1x32x128xf32> to vector<2x32x128xf32>
    %209 = arith.mulf %0, %208 : vector<2x32x128xf32>
    %cst_84 = arith.constant dense<0.000000e+00> : vector<2x32xf32>
    %210 = vector.multi_reduction <add>, %209, %cst_84 [2] : vector<2x32x128xf32> to vector<2x32xf32>
    %211 = vector.shape_cast %210 : vector<2x32xf32> to vector<2x32x1xf32>
    %212 = arith.addf %194, %211 : vector<2x32x1xf32>
    %cst_85 = arith.constant 0xFF800000 : f32
    %213 = vector.broadcast %cst_85 : f32 to vector<2x32x128xf32>
    %214 = arith.select %3, %209, %213 : vector<2x32x128xi1>, vector<2x32x128xf32>
    %cst_86 = arith.constant dense<0xFF800000> : vector<2x32xf32>
    %215 = vector.multi_reduction <maximumf>, %214, %cst_86 [2] : vector<2x32x128xf32> to vector<2x32xf32>
    %216 = vector.shape_cast %215 : vector<2x32xf32> to vector<2x32x1xf32>
    %217 = arith.addf %199, %216 : vector<2x32x1xf32>
    %cst_87 = arith.constant 0x7F800000 : f32
    %218 = vector.broadcast %cst_87 : f32 to vector<2x32x128xf32>
    %219 = arith.select %3, %209, %218 : vector<2x32x128xi1>, vector<2x32x128xf32>
    %cst_88 = arith.constant dense<0x7F800000> : vector<2x32xf32>
    %220 = vector.multi_reduction <minimumf>, %219, %cst_88 [2] : vector<2x32x128xf32> to vector<2x32xf32>
    %221 = vector.shape_cast %220 : vector<2x32xf32> to vector<2x32x1xf32>
    %222 = arith.addf %204, %221 : vector<2x32x1xf32>
    %c12 = arith.constant 12 : index
    %c0_89 = arith.constant 0 : index
    %c0_90 = arith.constant 0 : index
    %223 = vector.load %arg2[%c12, %c0_89, %c0_90] : memref<16x32x128xf32, #tpu.memory_space<vmem>>, vector<1x32x128xf32>
    %224 = vector.shape_cast %223 : vector<1x32x128xf32> to vector<32x128xf32>
    %225 = vector.shape_cast %224 : vector<32x128xf32> to vector<1x32x128xf32>
    %226 = vector.broadcast %225 : vector<1x32x128xf32> to vector<2x32x128xf32>
    %227 = arith.mulf %0, %226 : vector<2x32x128xf32>
    %cst_91 = arith.constant dense<0.000000e+00> : vector<2x32xf32>
    %228 = vector.multi_reduction <add>, %227, %cst_91 [2] : vector<2x32x128xf32> to vector<2x32xf32>
    %229 = vector.shape_cast %228 : vector<2x32xf32> to vector<2x32x1xf32>
    %230 = arith.addf %212, %229 : vector<2x32x1xf32>
    %cst_92 = arith.constant 0xFF800000 : f32
    %231 = vector.broadcast %cst_92 : f32 to vector<2x32x128xf32>
    %232 = arith.select %3, %227, %231 : vector<2x32x128xi1>, vector<2x32x128xf32>
    %cst_93 = arith.constant dense<0xFF800000> : vector<2x32xf32>
    %233 = vector.multi_reduction <maximumf>, %232, %cst_93 [2] : vector<2x32x128xf32> to vector<2x32xf32>
    %234 = vector.shape_cast %233 : vector<2x32xf32> to vector<2x32x1xf32>
    %235 = arith.addf %217, %234 : vector<2x32x1xf32>
    %cst_94 = arith.constant 0x7F800000 : f32
    %236 = vector.broadcast %cst_94 : f32 to vector<2x32x128xf32>
    %237 = arith.select %3, %227, %236 : vector<2x32x128xi1>, vector<2x32x128xf32>
    %cst_95 = arith.constant dense<0x7F800000> : vector<2x32xf32>
    %238 = vector.multi_reduction <minimumf>, %237, %cst_95 [2] : vector<2x32x128xf32> to vector<2x32xf32>
    %239 = vector.shape_cast %238 : vector<2x32xf32> to vector<2x32x1xf32>
    %240 = arith.addf %222, %239 : vector<2x32x1xf32>
    %c13 = arith.constant 13 : index
    %c0_96 = arith.constant 0 : index
    %c0_97 = arith.constant 0 : index
    %241 = vector.load %arg2[%c13, %c0_96, %c0_97] : memref<16x32x128xf32, #tpu.memory_space<vmem>>, vector<1x32x128xf32>
    %242 = vector.shape_cast %241 : vector<1x32x128xf32> to vector<32x128xf32>
    %243 = vector.shape_cast %242 : vector<32x128xf32> to vector<1x32x128xf32>
    %244 = vector.broadcast %243 : vector<1x32x128xf32> to vector<2x32x128xf32>
    %245 = arith.mulf %0, %244 : vector<2x32x128xf32>
    %cst_98 = arith.constant dense<0.000000e+00> : vector<2x32xf32>
    %246 = vector.multi_reduction <add>, %245, %cst_98 [2] : vector<2x32x128xf32> to vector<2x32xf32>
    %247 = vector.shape_cast %246 : vector<2x32xf32> to vector<2x32x1xf32>
    %248 = arith.addf %230, %247 : vector<2x32x1xf32>
    %cst_99 = arith.constant 0xFF800000 : f32
    %249 = vector.broadcast %cst_99 : f32 to vector<2x32x128xf32>
    %250 = arith.select %3, %245, %249 : vector<2x32x128xi1>, vector<2x32x128xf32>
    %cst_100 = arith.constant dense<0xFF800000> : vector<2x32xf32>
    %251 = vector.multi_reduction <maximumf>, %250, %cst_100 [2] : vector<2x32x128xf32> to vector<2x32xf32>
    %252 = vector.shape_cast %251 : vector<2x32xf32> to vector<2x32x1xf32>
    %253 = arith.addf %235, %252 : vector<2x32x1xf32>
    %cst_101 = arith.constant 0x7F800000 : f32
    %254 = vector.broadcast %cst_101 : f32 to vector<2x32x128xf32>
    %255 = arith.select %3, %245, %254 : vector<2x32x128xi1>, vector<2x32x128xf32>
    %cst_102 = arith.constant dense<0x7F800000> : vector<2x32xf32>
    %256 = vector.multi_reduction <minimumf>, %255, %cst_102 [2] : vector<2x32x128xf32> to vector<2x32xf32>
    %257 = vector.shape_cast %256 : vector<2x32xf32> to vector<2x32x1xf32>
    %258 = arith.addf %240, %257 : vector<2x32x1xf32>
    %c14 = arith.constant 14 : index
    %c0_103 = arith.constant 0 : index
    %c0_104 = arith.constant 0 : index
    %259 = vector.load %arg2[%c14, %c0_103, %c0_104] : memref<16x32x128xf32, #tpu.memory_space<vmem>>, vector<1x32x128xf32>
    %260 = vector.shape_cast %259 : vector<1x32x128xf32> to vector<32x128xf32>
    %261 = vector.shape_cast %260 : vector<32x128xf32> to vector<1x32x128xf32>
    %262 = vector.broadcast %261 : vector<1x32x128xf32> to vector<2x32x128xf32>
    %263 = arith.mulf %0, %262 : vector<2x32x128xf32>
    %cst_105 = arith.constant dense<0.000000e+00> : vector<2x32xf32>
    %264 = vector.multi_reduction <add>, %263, %cst_105 [2] : vector<2x32x128xf32> to vector<2x32xf32>
    %265 = vector.shape_cast %264 : vector<2x32xf32> to vector<2x32x1xf32>
    %266 = arith.addf %248, %265 : vector<2x32x1xf32>
    %cst_106 = arith.constant 0xFF800000 : f32
    %267 = vector.broadcast %cst_106 : f32 to vector<2x32x128xf32>
    %268 = arith.select %3, %263, %267 : vector<2x32x128xi1>, vector<2x32x128xf32>
    %cst_107 = arith.constant dense<0xFF800000> : vector<2x32xf32>
    %269 = vector.multi_reduction <maximumf>, %268, %cst_107 [2] : vector<2x32x128xf32> to vector<2x32xf32>
    %270 = vector.shape_cast %269 : vector<2x32xf32> to vector<2x32x1xf32>
    %271 = arith.addf %253, %270 : vector<2x32x1xf32>
    %cst_108 = arith.constant 0x7F800000 : f32
    %272 = vector.broadcast %cst_108 : f32 to vector<2x32x128xf32>
    %273 = arith.select %3, %263, %272 : vector<2x32x128xi1>, vector<2x32x128xf32>
    %cst_109 = arith.constant dense<0x7F800000> : vector<2x32xf32>
    %274 = vector.multi_reduction <minimumf>, %273, %cst_109 [2] : vector<2x32x128xf32> to vector<2x32xf32>
    %275 = vector.shape_cast %274 : vector<2x32xf32> to vector<2x32x1xf32>
    %276 = arith.addf %258, %275 : vector<2x32x1xf32>
    %c15 = arith.constant 15 : index
    %c0_110 = arith.constant 0 : index
    %c0_111 = arith.constant 0 : index
    %277 = vector.load %arg2[%c15, %c0_110, %c0_111] : memref<16x32x128xf32, #tpu.memory_space<vmem>>, vector<1x32x128xf32>
    %278 = vector.shape_cast %277 : vector<1x32x128xf32> to vector<32x128xf32>
    %279 = vector.shape_cast %278 : vector<32x128xf32> to vector<1x32x128xf32>
    %280 = vector.broadcast %279 : vector<1x32x128xf32> to vector<2x32x128xf32>
    %281 = arith.mulf %0, %280 : vector<2x32x128xf32>
    %cst_112 = arith.constant dense<0.000000e+00> : vector<2x32xf32>
    %282 = vector.multi_reduction <add>, %281, %cst_112 [2] : vector<2x32x128xf32> to vector<2x32xf32>
    %283 = vector.shape_cast %282 : vector<2x32xf32> to vector<2x32x1xf32>
    %284 = arith.addf %266, %283 : vector<2x32x1xf32>
    %cst_113 = arith.constant 0xFF800000 : f32
    %285 = vector.broadcast %cst_113 : f32 to vector<2x32x128xf32>
    %286 = arith.select %3, %281, %285 : vector<2x32x128xi1>, vector<2x32x128xf32>
    %cst_114 = arith.constant dense<0xFF800000> : vector<2x32xf32>
    %287 = vector.multi_reduction <maximumf>, %286, %cst_114 [2] : vector<2x32x128xf32> to vector<2x32xf32>
    %288 = vector.shape_cast %287 : vector<2x32xf32> to vector<2x32x1xf32>
    %289 = arith.addf %271, %288 : vector<2x32x1xf32>
    %cst_115 = arith.constant 0x7F800000 : f32
    %290 = vector.broadcast %cst_115 : f32 to vector<2x32x128xf32>
    %291 = arith.select %3, %281, %290 : vector<2x32x128xi1>, vector<2x32x128xf32>
    %cst_116 = arith.constant dense<0x7F800000> : vector<2x32xf32>
    %292 = vector.multi_reduction <minimumf>, %291, %cst_116 [2] : vector<2x32x128xf32> to vector<2x32xf32>
    %293 = vector.shape_cast %292 : vector<2x32xf32> to vector<2x32x1xf32>
    %294 = arith.addf %276, %293 : vector<2x32x1xf32>
    %cst_117 = arith.constant 0.00127551018 : f32
    %295 = vector.broadcast %cst_117 : f32 to vector<2x32x1xf32>
    %296 = arith.mulf %284, %295 : vector<2x32x1xf32>
    %cst_118 = arith.constant 6.250000e-02 : f32
    %297 = vector.broadcast %cst_118 : f32 to vector<2x32x1xf32>
    %298 = arith.mulf %289, %297 : vector<2x32x1xf32>
    %cst_119 = arith.constant 6.250000e-02 : f32
    %299 = vector.broadcast %cst_119 : f32 to vector<2x32x1xf32>
    %300 = arith.mulf %294, %299 : vector<2x32x1xf32>
    %301 = vector.extract_strided_slice %296 {offsets = [0, 0, 0], sizes = [1, 32, 1], strides = [1, 1, 1]} : vector<2x32x1xf32> to vector<1x32x1xf32>
    %302 = vector.shape_cast %301 : vector<1x32x1xf32> to vector<32x1xf32>
    %303 = vector.extract_strided_slice %296 {offsets = [1, 0, 0], sizes = [1, 32, 1], strides = [1, 1, 1]} : vector<2x32x1xf32> to vector<1x32x1xf32>
    %304 = vector.shape_cast %303 : vector<1x32x1xf32> to vector<32x1xf32>
    %305 = vector.extract_strided_slice %298 {offsets = [0, 0, 0], sizes = [1, 32, 1], strides = [1, 1, 1]} : vector<2x32x1xf32> to vector<1x32x1xf32>
    %306 = vector.shape_cast %305 : vector<1x32x1xf32> to vector<32x1xf32>
    %307 = vector.extract_strided_slice %298 {offsets = [1, 0, 0], sizes = [1, 32, 1], strides = [1, 1, 1]} : vector<2x32x1xf32> to vector<1x32x1xf32>
    %308 = vector.shape_cast %307 : vector<1x32x1xf32> to vector<32x1xf32>
    %309 = vector.extract_strided_slice %300 {offsets = [0, 0, 0], sizes = [1, 32, 1], strides = [1, 1, 1]} : vector<2x32x1xf32> to vector<1x32x1xf32>
    %310 = vector.shape_cast %309 : vector<1x32x1xf32> to vector<32x1xf32>
    %311 = vector.extract_strided_slice %300 {offsets = [1, 0, 0], sizes = [1, 32, 1], strides = [1, 1, 1]} : vector<2x32x1xf32> to vector<1x32x1xf32>
    %312 = vector.shape_cast %311 : vector<1x32x1xf32> to vector<32x1xf32>
    %313 = tpu.concatenate %302, %304, %306, %308, %310, %312 in 1 : vector<32x1xf32>, vector<32x1xf32>, vector<32x1xf32>, vector<32x1xf32>, vector<32x1xf32>, vector<32x1xf32> -> vector<32x6xf32>
    %c0_120 = arith.constant 0 : index
    %c0_121 = arith.constant 0 : index
    %314 = vector.load %arg3[%c0_120, %c0_121] : memref<2x32xf32, #tpu.memory_space<vmem>>, vector<2x32xf32>
    %cst_122 = arith.constant dense<0.000000e+00> : vector<2x6xf32>
    %315 = tpu.matmul %314, %313, %cst_122 {dimension_numbers = #tpu.dot_dimension_numbers<[1], [0], [0], [1], [0, 0, 1, 1], [], []>} : vector<2x32xf32>, vector<32x6xf32>, vector<2x6xf32> -> vector<2x6xf32>
    %cst_123 = arith.constant 0.000000e+00 : f32
    %316 = vector.broadcast %cst_123 : f32 to vector<2x6xf32>
    %317 = arith.maximumf %315, %316 : vector<2x6xf32>
    %c0_124 = arith.constant 0 : index
    %c0_125 = arith.constant 0 : index
    %318 = vector.load %arg4[%c0_124, %c0_125] : memref<32x2xf32, #tpu.memory_space<vmem>>, vector<32x2xf32>
    %cst_126 = arith.constant dense<0.000000e+00> : vector<32x6xf32>
    %319 = tpu.matmul %318, %317, %cst_126 {dimension_numbers = #tpu.dot_dimension_numbers<[1], [0], [0], [1], [0, 0, 1, 1], [], []>} : vector<32x2xf32>, vector<2x6xf32>, vector<32x6xf32> -> vector<32x6xf32>
    %320 = vector.extract_strided_slice %319 {offsets = [0, 0], sizes = [32, 2], strides = [1, 1]} : vector<32x6xf32> to vector<32x2xf32>
    %321 = vector.extract_strided_slice %319 {offsets = [0, 2], sizes = [32, 2], strides = [1, 1]} : vector<32x6xf32> to vector<32x2xf32>
    %322 = arith.addf %320, %321 : vector<32x2xf32>
    %323 = vector.extract_strided_slice %319 {offsets = [0, 4], sizes = [32, 2], strides = [1, 1]} : vector<32x6xf32> to vector<32x2xf32>
    %324 = arith.addf %322, %323 : vector<32x2xf32>
    %325 = arith.negf %324 : vector<32x2xf32>
    %326 = math.exp %325 : vector<32x2xf32>
    %cst_127 = arith.constant 1.000000e+00 : f32
    %327 = vector.broadcast %cst_127 : f32 to vector<32x2xf32>
    %328 = arith.addf %327, %326 : vector<32x2xf32>
    %329 = arith.divf %327, %328 : vector<32x2xf32>
    %330 = vector.extract_strided_slice %329 {offsets = [0, 0], sizes = [32, 1], strides = [1, 1]} : vector<32x2xf32> to vector<32x1xf32>
    %c0_128 = arith.constant 0 : index
    %c0_129 = arith.constant 0 : index
    %c0_130 = arith.constant 0 : index
    %331 = vector.load %arg5[%c0_128, %c0_129, %c0_130] : memref<2x32x1xf32, #tpu.memory_space<vmem>>, vector<1x32x1xf32>
    %332 = vector.shape_cast %331 : vector<1x32x1xf32> to vector<32x1xf32>
    %333 = vector.shape_cast %330 : vector<32x1xf32> to vector<1x32x1xf32>
    tpu.vector_store %arg5[%c0_128, %c0_129, %c0_130], %333 {strides = array<i32>} : memref<2x32x1xf32, #tpu.memory_space<vmem>>, vector<1x32x1xf32>,
    %334 = vector.extract_strided_slice %329 {offsets = [0, 1], sizes = [32, 1], strides = [1, 1]} : vector<32x2xf32> to vector<32x1xf32>
    %c1_131 = arith.constant 1 : index
    %c0_132 = arith.constant 0 : index
    %c0_133 = arith.constant 0 : index
    %335 = vector.load %arg5[%c1_131, %c0_132, %c0_133] : memref<2x32x1xf32, #tpu.memory_space<vmem>>, vector<1x32x1xf32>
    %336 = vector.shape_cast %335 : vector<1x32x1xf32> to vector<32x1xf32>
    %337 = vector.shape_cast %334 : vector<32x1xf32> to vector<1x32x1xf32>
    tpu.vector_store %arg5[%c1_131, %c0_132, %c0_133], %337 {strides = array<i32>} : memref<2x32x1xf32, #tpu.memory_space<vmem>>, vector<1x32x1xf32>,
    return
  }
  func.func @transform_0(%arg0: i32) -> (i32, i32, i32) {
    %c0_i32 = arith.constant 0 : i32
    %c0_i32_0 = arith.constant 0 : i32
    %c0_i32_1 = arith.constant 0 : i32
    return %arg0, %c0_i32, %c0_i32_0 : i32, i32, i32
  }
  func.func @transform_1(%arg0: i32) -> (i32, i32, i32) {
    %c0_i32 = arith.constant 0 : i32
    %c0_i32_0 = arith.constant 0 : i32
    %c0_i32_1 = arith.constant 0 : i32
    %c0_i32_2 = arith.constant 0 : i32
    return %c0_i32, %c0_i32_0, %c0_i32_1 : i32, i32, i32
  }
  func.func @transform_2(%arg0: i32) -> (i32, i32) {
    %c0_i32 = arith.constant 0 : i32
    %c0_i32_0 = arith.constant 0 : i32
    %c0_i32_1 = arith.constant 0 : i32
    return %c0_i32, %c0_i32_0 : i32, i32
  }
  func.func @transform_3(%arg0: i32) -> (i32, i32) {
    %c0_i32 = arith.constant 0 : i32
    %c0_i32_0 = arith.constant 0 : i32
    %c0_i32_1 = arith.constant 0 : i32
    return %c0_i32, %c0_i32_0 : i32, i32
  }
  func.func @transform_4(%arg0: i32) -> (i32, i32, i32) {
    %c0_i32 = arith.constant 0 : i32
    %c0_i32_0 = arith.constant 0 : i32
    %c0_i32_1 = arith.constant 0 : i32
    return %arg0, %c0_i32, %c0_i32_0 : i32, i32, i32
  }
}

</mosaic_0001>

<llo_original>
// kernel: tpu_custom_call.1
$region0: #{tpu_custom_call.1}
  #allocation0 [shape = 'u32[]', space=smem, size = 0x4, offset = 0x4, fixed_abs, tag = 'smem constant byte address 0x4 - core index']
  #allocation1 [shape = 'u32[144,128]{1,0:T(1,128)}', space=vmem, size = 0x12000, scoped, tag = 'internal scratch']
  %s0 = inlined_call_operand.hbm [shape: f32[2,32,128], index: 0, kind: input, shape index: {}]
  %s1 = inlined_call_operand.hbm [shape: f32[16,32,128], index: 1, kind: input, shape index: {}]
  %s2 = inlined_call_operand.vmem [shape: f32[2,32], index: 2, kind: input, shape index: {}]
  %s3 = inlined_call_operand.vmem [shape: f32[32,2], index: 3, kind: input, shape index: {}]
  %s4 = inlined_call_operand.vmem [shape: f32[2,32,1], index: 4, kind: output, shape index: {}]
  %s5 = sld [smem:[#allocation0]]
  $region34: #{tpu_custom_call.1} parent=0
    _
  %s7 = ssub.s32 1, %s5
  %s8 = scalar_select 0, %s7, %s5
  $region1: #{tpu_custom_call.1} parent=0
    #allocation2 [shape = 'u8[32768]{0}', space=vmem, size = 0x8000, scoped, tag = 'input window, operand 0, single buffered']
    #allocation3 [shape = 's32[1]{0}', space=sflag, size = 0x4, scoped, tag = 'scoped memory for tpu_custom_call.1']
    #allocation4 [shape = 'u8[262144]{0}', space=vmem, size = 0x40000, scoped, tag = 'input window, operand 1, single buffered']
    #allocation5 [shape = 's32[1]{0}', space=sflag, size = 0x4, scoped, tag = 'scoped memory for tpu_custom_call.1']
    %9 = vsyncpa [#allocation3], 0
    %10 = vsyncpa [#allocation5], 0
    // Predicated region
    $region2: #{tpu_custom_call.1} parent=1 // pred_check
      _
    $region3: #{tpu_custom_call.1} parent=1 // pred_check_branch
      %12 = sbr.rel (0) target = $region5
    $region4: #{tpu_custom_call.1} parent=1 // pred_region
      %s14 = ssub.s32 1024, 1024
      %15 = vsyncadd [#allocation3], %s14
      %s16 = sshll.u32 [#allocation2], 4
      %s17 = int_to_ptr.vmem [resolvable:$true] %s16
      %22 = dma.hbm_to_vmem [thread:$0]  %s0, 1024, %s17, [#allocation3], 128, 128, 8
    $region5: #{tpu_custom_call.1} parent=1 // pred_fallthru
      _
    // Predicated region
    $region6: #{tpu_custom_call.1} parent=1 // pred_check
      _
    $region7: #{tpu_custom_call.1} parent=1 // pred_check_branch
      %24 = sbr.rel (0) target = $region9
    $region8: #{tpu_custom_call.1} parent=1 // pred_region
      %s26 = ssub.s32 8192, 8192
      %27 = vsyncadd [#allocation5], %s26
      %s28 = sshll.u32 [#allocation4], 4
      %s29 = int_to_ptr.vmem [resolvable:$true] %s28
      %34 = dma.hbm_to_vmem [thread:$0]  %s1, 8192, %s29, [#allocation5], 128, 128, 8
    $region9: #{tpu_custom_call.1} parent=1 // pred_fallthru
      _
    // Predicated region
    $region10: #{tpu_custom_call.1} parent=1 // pred_check
      _
    $region11: #{tpu_custom_call.1} parent=1 // pred_check_branch
      %36 = sbr.rel (0) target = $region13
    $region12: #{tpu_custom_call.1} parent=1 // pred_region
      _
    $region13: #{tpu_custom_call.1} parent=1 // pred_fallthru
      _
    // Predicated region
    $region14: #{tpu_custom_call.1} parent=1 // pred_check
      _
    $region15: #{tpu_custom_call.1} parent=1 // pred_check_branch
      %38 = sbr.rel (0) target = $region17
    $region16: #{tpu_custom_call.1} parent=1 // pred_region
      _
    $region17: #{tpu_custom_call.1} parent=1 // pred_fallthru
      _
    // Predicated region
    $region18: #{tpu_custom_call.1} parent=1 // pred_check
      _
    $region19: #{tpu_custom_call.1} parent=1 // pred_check_branch
      %40 = sbr.rel (0) target = $region21
    $region20: #{tpu_custom_call.1} parent=1 // pred_region
      %41 = dma.done [#allocation3], 1024
    $region21: #{tpu_custom_call.1} parent=1 // pred_fallthru
      _
    // Predicated region
    $region22: #{tpu_custom_call.1} parent=1 // pred_check
      _
    $region23: #{tpu_custom_call.1} parent=1 // pred_check_branch
      %43 = sbr.rel (0) target = $region25
    $region24: #{tpu_custom_call.1} parent=1 // pred_region
      %44 = dma.done [#allocation5], 8192
    $region25: #{tpu_custom_call.1} parent=1 // pred_fallthru
      _
    %v45 = vld [vmem:[#allocation2] sm:$0xff]
    %v46 = vld [vmem:[#allocation2 + $0x8] sm:$0xff]
    %v47 = vld [vmem:[#allocation2 + $0x10] sm:$0xff]
    %v48 = vld [vmem:[#allocation2 + $0x18] sm:$0xff]
    %v49 = vld [vmem:[#allocation2 + $0x20] sm:$0xff]
    %v50 = vld [vmem:[#allocation2 + $0x28] sm:$0xff]
    %v51 = vld [vmem:[#allocation2 + $0x30] sm:$0xff]
    %v52 = vld [vmem:[#allocation2 + $0x38] sm:$0xff]
    %v53 = vlaneseq
    %v54 = vand.u32 %v53, 127
    %vm55 = vcmp.lt.s32.totalorder %v54, 49
    %v56 = vld [vmem:[#allocation4] sm:$0xff]
    %v57 = vld [vmem:[#allocation4 + $0x8] sm:$0xff]
    %v58 = vld [vmem:[#allocation4 + $0x10] sm:$0xff]
    %v59 = vld [vmem:[#allocation4 + $0x18] sm:$0xff]
    %v60 = vmul.f32 %v45, %v56
    %v61 = vmul.f32 %v46, %v57
    %v62 = vmul.f32 %v47, %v58
    %v63 = vmul.f32 %v48, %v59
    %v64 = vmul.f32 %v49, %v56
    %v65 = vmul.f32 %v50, %v57
    %v66 = vmul.f32 %v51, %v58
    %v67 = vmul.f32 %v52, %v59
    %68 = vadd.xlane.f32.xlu0 %v60
    %v69 = vpop.xlane.xlu0 %68
    %70 = vadd.xlane.f32.xlu0 %v61
    %v71 = vpop.xlane.xlu0 %70
    %72 = vadd.xlane.f32.xlu0 %v62
    %v73 = vpop.xlane.xlu0 %72
    %74 = vadd.xlane.f32.xlu0 %v63
    %v75 = vpop.xlane.xlu0 %74
    %76 = vadd.xlane.f32.xlu0 %v64
    %v77 = vpop.xlane.xlu0 %76
    %78 = vadd.xlane.f32.xlu0 %v65
    %v79 = vpop.xlane.xlu0 %78
    %80 = vadd.xlane.f32.xlu0 %v66
    %v81 = vpop.xlane.xlu0 %80
    %82 = vadd.xlane.f32.xlu0 %v67
    %v83 = vpop.xlane.xlu0 %82
    %v84 = vadd.f32 %v69, 0.0
    %v85 = vadd.f32 %v71, 0.0
    %v86 = vadd.f32 %v73, 0.0
    %v87 = vadd.f32 %v75, 0.0
    %v88 = vadd.f32 %v77, 0.0
    %v89 = vadd.f32 %v79, 0.0
    %v90 = vadd.f32 %v81, 0.0
    %v91 = vadd.f32 %v83, 0.0
    %v92 = vsel %vm55, %v60, -inf
    %v93 = vsel %vm55, %v61, -inf
    %v94 = vsel %vm55, %v62, -inf
    %v95 = vsel %vm55, %v63, -inf
    %v96 = vsel %vm55, %v64, -inf
    %v97 = vsel %vm55, %v65, -inf
    %v98 = vsel %vm55, %v66, -inf
    %v99 = vsel %vm55, %v67, -inf
    %100 = vmax.xlane.f32.xlu0 %v92
    %v101 = vpop.xlane.xlu0 %100
    %102 = vmax.xlane.f32.xlu0 %v93
    %v103 = vpop.xlane.xlu0 %102
    %104 = vmax.xlane.f32.xlu0 %v94
    %v105 = vpop.xlane.xlu0 %104
    %106 = vmax.xlane.f32.xlu0 %v95
    %v107 = vpop.xlane.xlu0 %106
    %108 = vmax.xlane.f32.xlu0 %v96
    %v109 = vpop.xlane.xlu0 %108
    %110 = vmax.xlane.f32.xlu0 %v97
    %v111 = vpop.xlane.xlu0 %110
    %112 = vmax.xlane.f32.xlu0 %v98
    %v113 = vpop.xlane.xlu0 %112
    %114 = vmax.xlane.f32.xlu0 %v99
    %v115 = vpop.xlane.xlu0 %114
    %v116 = vadd.f32 %v101, 0.0
    %v117 = vadd.f32 %v103, 0.0
    %v118 = vadd.f32 %v105, 0.0
    %v119 = vadd.f32 %v107, 0.0
    %v120 = vadd.f32 %v109, 0.0
    %v121 = vadd.f32 %v111, 0.0
    %v122 = vadd.f32 %v113, 0.0
    %v123 = vadd.f32 %v115, 0.0
    %v124 = vsel %vm55, %v60, inf
    %v125 = vsel %vm55, %v61, inf
    %v126 = vsel %vm55, %v62, inf
    %v127 = vsel %vm55, %v63, inf
    %v128 = vsel %vm55, %v64, inf
    %v129 = vsel %vm55, %v65, inf
    %v130 = vsel %vm55, %v66, inf
    %v131 = vsel %vm55, %v67, inf
    %132 = vmin.xlane.f32.xlu0 %v124
    %v133 = vpop.xlane.xlu0 %132
    %134 = vmin.xlane.f32.xlu0 %v125
    %v135 = vpop.xlane.xlu0 %134
    %136 = vmin.xlane.f32.xlu0 %v126
    %v137 = vpop.xlane.xlu0 %136
    %138 = vmin.xlane.f32.xlu0 %v127
    %v139 = vpop.xlane.xlu0 %138
    %140 = vmin.xlane.f32.xlu0 %v128
    %v141 = vpop.xlane.xlu0 %140
    %142 = vmin.xlane.f32.xlu0 %v129
    %v143 = vpop.xlane.xlu0 %142
    %144 = vmin.xlane.f32.xlu0 %v130
    %v145 = vpop.xlane.xlu0 %144
    %146 = vmin.xlane.f32.xlu0 %v131
    %v147 = vpop.xlane.xlu0 %146
    %v148 = vadd.f32 %v133, 0.0
    %v149 = vadd.f32 %v135, 0.0
    %v150 = vadd.f32 %v137, 0.0
    %v151 = vadd.f32 %v139, 0.0
    %v152 = vadd.f32 %v141, 0.0
    %v153 = vadd.f32 %v143, 0.0
    %v154 = vadd.f32 %v145, 0.0
    %v155 = vadd.f32 %v147, 0.0
    %s156 = scalar_lea.vmem [#allocation4], 32
    %v157 = vld [vmem:[%s156] sm:$0xff]
    %v158 = vld [vmem:[%s156 + $0x8] sm:$0xff]
    %v159 = vld [vmem:[%s156 + $0x10] sm:$0xff]
    %v160 = vld [vmem:[%s156 + $0x18] sm:$0xff]
    %v161 = vmul.f32 %v45, %v157
    %v162 = vmul.f32 %v46, %v158
    %v163 = vmul.f32 %v47, %v159
    %v164 = vmul.f32 %v48, %v160
    %v165 = vmul.f32 %v49, %v157
    %v166 = vmul.f32 %v50, %v158
    %v167 = vmul.f32 %v51, %v159
    %v168 = vmul.f32 %v52, %v160
    %169 = vadd.xlane.f32.xlu0 %v161
    %v170 = vpop.xlane.xlu0 %169
    %171 = vadd.xlane.f32.xlu0 %v162
    %v172 = vpop.xlane.xlu0 %171
    %173 = vadd.xlane.f32.xlu0 %v163
    %v174 = vpop.xlane.xlu0 %173
    %175 = vadd.xlane.f32.xlu0 %v164
    %v176 = vpop.xlane.xlu0 %175
    %177 = vadd.xlane.f32.xlu0 %v165
    %v178 = vpop.xlane.xlu0 %177
    %179 = vadd.xlane.f32.xlu0 %v166
    %v180 = vpop.xlane.xlu0 %179
    %181 = vadd.xlane.f32.xlu0 %v167
    %v182 = vpop.xlane.xlu0 %181
    %183 = vadd.xlane.f32.xlu0 %v168
    %v184 = vpop.xlane.xlu0 %183
    %v185 = vadd.f32 %v84, %v170
    %v186 = vadd.f32 %v85, %v172
    %v187 = vadd.f32 %v86, %v174
    %v188 = vadd.f32 %v87, %v176
    %v189 = vadd.f32 %v88, %v178
    %v190 = vadd.f32 %v89, %v180
    %v191 = vadd.f32 %v90, %v182
    %v192 = vadd.f32 %v91, %v184
    %v193 = vsel %vm55, %v161, -inf
    %v194 = vsel %vm55, %v162, -inf
    %v195 = vsel %vm55, %v163, -inf
    %v196 = vsel %vm55, %v164, -inf
    %v197 = vsel %vm55, %v165, -inf
    %v198 = vsel %vm55, %v166, -inf
    %v199 = vsel %vm55, %v167, -inf
    %v200 = vsel %vm55, %v168, -inf
    %201 = vmax.xlane.f32.xlu0 %v193
    %v202 = vpop.xlane.xlu0 %201
    %203 = vmax.xlane.f32.xlu0 %v194
    %v204 = vpop.xlane.xlu0 %203
    %205 = vmax.xlane.f32.xlu0 %v195
    %v206 = vpop.xlane.xlu0 %205
    %207 = vmax.xlane.f32.xlu0 %v196
    %v208 = vpop.xlane.xlu0 %207
    %209 = vmax.xlane.f32.xlu0 %v197
    %v210 = vpop.xlane.xlu0 %209
    %211 = vmax.xlane.f32.xlu0 %v198
    %v212 = vpop.xlane.xlu0 %211
    %213 = vmax.xlane.f32.xlu0 %v199
    %v214 = vpop.xlane.xlu0 %213
    %215 = vmax.xlane.f32.xlu0 %v200
    %v216 = vpop.xlane.xlu0 %215
    %v217 = vadd.f32 %v116, %v202
    %v218 = vadd.f32 %v117, %v204
    %v219 = vadd.f32 %v118, %v206
    %v220 = vadd.f32 %v119, %v208
    %v221 = vadd.f32 %v120, %v210
    %v222 = vadd.f32 %v121, %v212
    %v223 = vadd.f32 %v122, %v214
    %v224 = vadd.f32 %v123, %v216
    %v225 = vsel %vm55, %v161, inf
    %v226 = vsel %vm55, %v162, inf
    %v227 = vsel %vm55, %v163, inf
    %v228 = vsel %vm55, %v164, inf
    %v229 = vsel %vm55, %v165, inf
    %v230 = vsel %vm55, %v166, inf
    %v231 = vsel %vm55, %v167, inf
    %v232 = vsel %vm55, %v168, inf
    %233 = vmin.xlane.f32.xlu0 %v225
    %v234 = vpop.xlane.xlu0 %233
    %235 = vmin.xlane.f32.xlu0 %v226
    %v236 = vpop.xlane.xlu0 %235
    %237 = vmin.xlane.f32.xlu0 %v227
    %v238 = vpop.xlane.xlu0 %237
    %239 = vmin.xlane.f32.xlu0 %v228
    %v240 = vpop.xlane.xlu0 %239
    %241 = vmin.xlane.f32.xlu0 %v229
    %v242 = vpop.xlane.xlu0 %241
    %243 = vmin.xlane.f32.xlu0 %v230
    %v244 = vpop.xlane.xlu0 %243
    %245 = vmin.xlane.f32.xlu0 %v231
    %v246 = vpop.xlane.xlu0 %245
    %247 = vmin.xlane.f32.xlu0 %v232
    %v248 = vpop.xlane.xlu0 %247
    %v249 = vadd.f32 %v148, %v234
    %v250 = vadd.f32 %v149, %v236
    %v251 = vadd.f32 %v150, %v238
    %v252 = vadd.f32 %v151, %v240
    %v253 = vadd.f32 %v152, %v242
    %v254 = vadd.f32 %v153, %v244
    %v255 = vadd.f32 %v154, %v246
    %v256 = vadd.f32 %v155, %v248
    %s257 = scalar_lea.vmem [#allocation4], 64
    %v258 = vld [vmem:[%s257] sm:$0xff]
    %v259 = vld [vmem:[%s257 + $0x8] sm:$0xff]
    %v260 = vld [vmem:[%s257 + $0x10] sm:$0xff]
    %v261 = vld [vmem:[%s257 + $0x18] sm:$0xff]
    %v262 = vmul.f32 %v45, %v258
    %v263 = vmul.f32 %v46, %v259
    %v264 = vmul.f32 %v47, %v260
    %v265 = vmul.f32 %v48, %v261
    %v266 = vmul.f32 %v49, %v258
    %v267 = vmul.f32 %v50, %v259
    %v268 = vmul.f32 %v51, %v260
    %v269 = vmul.f32 %v52, %v261
    %270 = vadd.xlane.f32.xlu0 %v262
    %v271 = vpop.xlane.xlu0 %270
    %272 = vadd.xlane.f32.xlu0 %v263
    %v273 = vpop.xlane.xlu0 %272
    %274 = vadd.xlane.f32.xlu0 %v264
    %v275 = vpop.xlane.xlu0 %274
    %276 = vadd.xlane.f32.xlu0 %v265
    %v277 = vpop.xlane.xlu0 %276
    %278 = vadd.xlane.f32.xlu0 %v266
    %v279 = vpop.xlane.xlu0 %278
    %280 = vadd.xlane.f32.xlu0 %v267
    %v281 = vpop.xlane.xlu0 %280
    %282 = vadd.xlane.f32.xlu0 %v268
    %v283 = vpop.xlane.xlu0 %282
    %284 = vadd.xlane.f32.xlu0 %v269
    %v285 = vpop.xlane.xlu0 %284
    %v286 = vadd.f32 %v185, %v271
    %v287 = vadd.f32 %v186, %v273
    %v288 = vadd.f32 %v187, %v275
    %v289 = vadd.f32 %v188, %v277
    %v290 = vadd.f32 %v189, %v279
    %v291 = vadd.f32 %v190, %v281
    %v292 = vadd.f32 %v191, %v283
    %v293 = vadd.f32 %v192, %v285
    %v294 = vsel %vm55, %v262, -inf
    %v295 = vsel %vm55, %v263, -inf
    %v296 = vsel %vm55, %v264, -inf
    %v297 = vsel %vm55, %v265, -inf
    %v298 = vsel %vm55, %v266, -inf
    %v299 = vsel %vm55, %v267, -inf
    %v300 = vsel %vm55, %v268, -inf
    %v301 = vsel %vm55, %v269, -inf
    %302 = vmax.xlane.f32.xlu0 %v294
    %v303 = vpop.xlane.xlu0 %302
    %304 = vmax.xlane.f32.xlu0 %v295
    %v305 = vpop.xlane.xlu0 %304
    %306 = vmax.xlane.f32.xlu0 %v296
    %v307 = vpop.xlane.xlu0 %306
    %308 = vmax.xlane.f32.xlu0 %v297
    %v309 = vpop.xlane.xlu0 %308
    %310 = vmax.xlane.f32.xlu0 %v298
    %v311 = vpop.xlane.xlu0 %310
    %312 = vmax.xlane.f32.xlu0 %v299
    %v313 = vpop.xlane.xlu0 %312
    %314 = vmax.xlane.f32.xlu0 %v300
    %v315 = vpop.xlane.xlu0 %314
    %316 = vmax.xlane.f32.xlu0 %v301
    %v317 = vpop.xlane.xlu0 %316
    %v318 = vadd.f32 %v217, %v303
    %v319 = vadd.f32 %v218, %v305
    %v320 = vadd.f32 %v219, %v307
    %v321 = vadd.f32 %v220, %v309
    %v322 = vadd.f32 %v221, %v311
    %v323 = vadd.f32 %v222, %v313
    %v324 = vadd.f32 %v223, %v315
    %v325 = vadd.f32 %v224, %v317
    %v326 = vsel %vm55, %v262, inf
    %v327 = vsel %vm55, %v263, inf
    %v328 = vsel %vm55, %v264, inf
    %v329 = vsel %vm55, %v265, inf
    %v330 = vsel %vm55, %v266, inf
    %v331 = vsel %vm55, %v267, inf
    %v332 = vsel %vm55, %v268, inf
    %v333 = vsel %vm55, %v269, inf
    %334 = vmin.xlane.f32.xlu0 %v326
    %v335 = vpop.xlane.xlu0 %334
    %336 = vmin.xlane.f32.xlu0 %v327
    %v337 = vpop.xlane.xlu0 %336
    %338 = vmin.xlane.f32.xlu0 %v328
    %v339 = vpop.xlane.xlu0 %338
    %340 = vmin.xlane.f32.xlu0 %v329
    %v341 = vpop.xlane.xlu0 %340
    %342 = vmin.xlane.f32.xlu0 %v330
    %v343 = vpop.xlane.xlu0 %342
    %344 = vmin.xlane.f32.xlu0 %v331
    %v345 = vpop.xlane.xlu0 %344
    %346 = vmin.xlane.f32.xlu0 %v332
    %v347 = vpop.xlane.xlu0 %346
    %348 = vmin.xlane.f32.xlu0 %v333
    %v349 = vpop.xlane.xlu0 %348
    %v350 = vadd.f32 %v249, %v335
    %v351 = vadd.f32 %v250, %v337
    %v352 = vadd.f32 %v251, %v339
    %v353 = vadd.f32 %v252, %v341
    %v354 = vadd.f32 %v253, %v343
    %v355 = vadd.f32 %v254, %v345
    %v356 = vadd.f32 %v255, %v347
    %v357 = vadd.f32 %v256, %v349
    %s358 = scalar_lea.vmem [#allocation4], 96
    %v359 = vld [vmem:[%s358] sm:$0xff]
    %v360 = vld [vmem:[%s358 + $0x8] sm:$0xff]
    %v361 = vld [vmem:[%s358 + $0x10] sm:$0xff]
    %v362 = vld [vmem:[%s358 + $0x18] sm:$0xff]
    %v363 = vmul.f32 %v45, %v359
    %v364 = vmul.f32 %v46, %v360
    %v365 = vmul.f32 %v47, %v361
    %v366 = vmul.f32 %v48, %v362
    %v367 = vmul.f32 %v49, %v359
    %v368 = vmul.f32 %v50, %v360
    %v369 = vmul.f32 %v51, %v361
    %v370 = vmul.f32 %v52, %v362
    %371 = vadd.xlane.f32.xlu0 %v363
    %v372 = vpop.xlane.xlu0 %371
    %373 = vadd.xlane.f32.xlu0 %v364
    %v374 = vpop.xlane.xlu0 %373
    %375 = vadd.xlane.f32.xlu0 %v365
    %v376 = vpop.xlane.xlu0 %375
    %377 = vadd.xlane.f32.xlu0 %v366
    %v378 = vpop.xlane.xlu0 %377
    %379 = vadd.xlane.f32.xlu0 %v367
    %v380 = vpop.xlane.xlu0 %379
    %381 = vadd.xlane.f32.xlu0 %v368
    %v382 = vpop.xlane.xlu0 %381
    %383 = vadd.xlane.f32.xlu0 %v369
    %v384 = vpop.xlane.xlu0 %383
    %385 = vadd.xlane.f32.xlu0 %v370
    %v386 = vpop.xlane.xlu0 %385
    %v387 = vadd.f32 %v286, %v372
    %v388 = vadd.f32 %v287, %v374
    %v389 = vadd.f32 %v288, %v376
    %v390 = vadd.f32 %v289, %v378
    %v391 = vadd.f32 %v290, %v380
    %v392 = vadd.f32 %v291, %v382
    %v393 = vadd.f32 %v292, %v384
    %v394 = vadd.f32 %v293, %v386
    %v395 = vsel %vm55, %v363, -inf
    %v396 = vsel %vm55, %v364, -inf
    %v397 = vsel %vm55, %v365, -inf
    %v398 = vsel %vm55, %v366, -inf
    %v399 = vsel %vm55, %v367, -inf
    %v400 = vsel %vm55, %v368, -inf
    %v401 = vsel %vm55, %v369, -inf
    %v402 = vsel %vm55, %v370, -inf
    %403 = vmax.xlane.f32.xlu0 %v395
    %v404 = vpop.xlane.xlu0 %403
    %405 = vmax.xlane.f32.xlu0 %v396
    %v406 = vpop.xlane.xlu0 %405
    %407 = vmax.xlane.f32.xlu0 %v397
    %v408 = vpop.xlane.xlu0 %407
    %409 = vmax.xlane.f32.xlu0 %v398
    %v410 = vpop.xlane.xlu0 %409
    %411 = vmax.xlane.f32.xlu0 %v399
    %v412 = vpop.xlane.xlu0 %411
    %413 = vmax.xlane.f32.xlu0 %v400
    %v414 = vpop.xlane.xlu0 %413
    %415 = vmax.xlane.f32.xlu0 %v401
    %v416 = vpop.xlane.xlu0 %415
    %417 = vmax.xlane.f32.xlu0 %v402
    %v418 = vpop.xlane.xlu0 %417
    %v419 = vadd.f32 %v318, %v404
    %v420 = vadd.f32 %v319, %v406
    %v421 = vadd.f32 %v320, %v408
    %v422 = vadd.f32 %v321, %v410
    %v423 = vadd.f32 %v322, %v412
    %v424 = vadd.f32 %v323, %v414
    %v425 = vadd.f32 %v324, %v416
    %v426 = vadd.f32 %v325, %v418
    %v427 = vsel %vm55, %v363, inf
    %v428 = vsel %vm55, %v364, inf
    %v429 = vsel %vm55, %v365, inf
    %v430 = vsel %vm55, %v366, inf
    %v431 = vsel %vm55, %v367, inf
    %v432 = vsel %vm55, %v368, inf
    %v433 = vsel %vm55, %v369, inf
    %v434 = vsel %vm55, %v370, inf
    %435 = vmin.xlane.f32.xlu0 %v427
    %v436 = vpop.xlane.xlu0 %435
    %437 = vmin.xlane.f32.xlu0 %v428
    %v438 = vpop.xlane.xlu0 %437
    %439 = vmin.xlane.f32.xlu0 %v429
    %v440 = vpop.xlane.xlu0 %439
    %441 = vmin.xlane.f32.xlu0 %v430
    %v442 = vpop.xlane.xlu0 %441
    %443 = vmin.xlane.f32.xlu0 %v431
    %v444 = vpop.xlane.xlu0 %443
    %445 = vmin.xlane.f32.xlu0 %v432
    %v446 = vpop.xlane.xlu0 %445
    %447 = vmin.xlane.f32.xlu0 %v433
    %v448 = vpop.xlane.xlu0 %447
    %449 = vmin.xlane.f32.xlu0 %v434
    %v450 = vpop.xlane.xlu0 %449
    %v451 = vadd.f32 %v350, %v436
    %v452 = vadd.f32 %v351, %v438
    %v453 = vadd.f32 %v352, %v440
    %v454 = vadd.f32 %v353, %v442
    %v455 = vadd.f32 %v354, %v444
    %v456 = vadd.f32 %v355, %v446
    %v457 = vadd.f32 %v356, %v448
    %v458 = vadd.f32 %v357, %v450
    %s459 = scalar_lea.vmem [#allocation4], 128
    %v460 = vld [vmem:[%s459] sm:$0xff]
    %v461 = vld [vmem:[%s459 + $0x8] sm:$0xff]
    %v462 = vld [vmem:[%s459 + $0x10] sm:$0xff]
    %v463 = vld [vmem:[%s459 + $0x18] sm:$0xff]
    %v464 = vmul.f32 %v45, %v460
    %v465 = vmul.f32 %v46, %v461
    %v466 = vmul.f32 %v47, %v462
    %v467 = vmul.f32 %v48, %v463
    %v468 = vmul.f32 %v49, %v460
    %v469 = vmul.f32 %v50, %v461
    %v470 = vmul.f32 %v51, %v462
    %v471 = vmul.f32 %v52, %v463
    %472 = vadd.xlane.f32.xlu0 %v464
    %v473 = vpop.xlane.xlu0 %472
    %474 = vadd.xlane.f32.xlu0 %v465
    %v475 = vpop.xlane.xlu0 %474
    %476 = vadd.xlane.f32.xlu0 %v466
    %v477 = vpop.xlane.xlu0 %476
    %478 = vadd.xlane.f32.xlu0 %v467
    %v479 = vpop.xlane.xlu0 %478
    %480 = vadd.xlane.f32.xlu0 %v468
    %v481 = vpop.xlane.xlu0 %480
    %482 = vadd.xlane.f32.xlu0 %v469
    %v483 = vpop.xlane.xlu0 %482
    %484 = vadd.xlane.f32.xlu0 %v470
    %v485 = vpop.xlane.xlu0 %484
    %486 = vadd.xlane.f32.xlu0 %v471
    %v487 = vpop.xlane.xlu0 %486
    %v488 = vadd.f32 %v387, %v473
    %v489 = vadd.f32 %v388, %v475
    %v490 = vadd.f32 %v389, %v477
    %v491 = vadd.f32 %v390, %v479
    %v492 = vadd.f32 %v391, %v481
    %v493 = vadd.f32 %v392, %v483
    %v494 = vadd.f32 %v393, %v485
    %v495 = vadd.f32 %v394, %v487
    %v496 = vsel %vm55, %v464, -inf
    %v497 = vsel %vm55, %v465, -inf
    %v498 = vsel %vm55, %v466, -inf
    %v499 = vsel %vm55, %v467, -inf
    %v500 = vsel %vm55, %v468, -inf
    %v501 = vsel %vm55, %v469, -inf
    %v502 = vsel %vm55, %v470, -inf
    %v503 = vsel %vm55, %v471, -inf
    %504 = vmax.xlane.f32.xlu0 %v496
    %v505 = vpop.xlane.xlu0 %504
    %506 = vmax.xlane.f32.xlu0 %v497
    %v507 = vpop.xlane.xlu0 %506
    %508 = vmax.xlane.f32.xlu0 %v498
    %v509 = vpop.xlane.xlu0 %508
    %510 = vmax.xlane.f32.xlu0 %v499
    %v511 = vpop.xlane.xlu0 %510
    %512 = vmax.xlane.f32.xlu0 %v500
    %v513 = vpop.xlane.xlu0 %512
    %514 = vmax.xlane.f32.xlu0 %v501
    %v515 = vpop.xlane.xlu0 %514
    %516 = vmax.xlane.f32.xlu0 %v502
    %v517 = vpop.xlane.xlu0 %516
    %518 = vmax.xlane.f32.xlu0 %v503
    %v519 = vpop.xlane.xlu0 %518
    %v520 = vadd.f32 %v419, %v505
    %v521 = vadd.f32 %v420, %v507
    %v522 = vadd.f32 %v421, %v509
    %v523 = vadd.f32 %v422, %v511
    %v524 = vadd.f32 %v423, %v513
    %v525 = vadd.f32 %v424, %v515
    %v526 = vadd.f32 %v425, %v517
    %v527 = vadd.f32 %v426, %v519
    %v528 = vsel %vm55, %v464, inf
    %v529 = vsel %vm55, %v465, inf
    %v530 = vsel %vm55, %v466, inf
    %v531 = vsel %vm55, %v467, inf
    %v532 = vsel %vm55, %v468, inf
    %v533 = vsel %vm55, %v469, inf
    %v534 = vsel %vm55, %v470, inf
    %v535 = vsel %vm55, %v471, inf
    %536 = vmin.xlane.f32.xlu0 %v528
    %v537 = vpop.xlane.xlu0 %536
    %538 = vmin.xlane.f32.xlu0 %v529
    %v539 = vpop.xlane.xlu0 %538
    %540 = vmin.xlane.f32.xlu0 %v530
    %v541 = vpop.xlane.xlu0 %540
    %542 = vmin.xlane.f32.xlu0 %v531
    %v543 = vpop.xlane.xlu0 %542
    %544 = vmin.xlane.f32.xlu0 %v532
    %v545 = vpop.xlane.xlu0 %544
    %546 = vmin.xlane.f32.xlu0 %v533
    %v547 = vpop.xlane.xlu0 %546
    %548 = vmin.xlane.f32.xlu0 %v534
    %v549 = vpop.xlane.xlu0 %548
    %550 = vmin.xlane.f32.xlu0 %v535
    %v551 = vpop.xlane.xlu0 %550
    %v552 = vadd.f32 %v451, %v537
    %v553 = vadd.f32 %v452, %v539
    %v554 = vadd.f32 %v453, %v541
    %v555 = vadd.f32 %v454, %v543
    %v556 = vadd.f32 %v455, %v545
    %v557 = vadd.f32 %v456, %v547
    %v558 = vadd.f32 %v457, %v549
    %v559 = vadd.f32 %v458, %v551
    %s560 = scalar_lea.vmem [#allocation4], 160
    %v561 = vld [vmem:[%s560] sm:$0xff]
    %v562 = vld [vmem:[%s560 + $0x8] sm:$0xff]
    %v563 = vld [vmem:[%s560 + $0x10] sm:$0xff]
    %v564 = vld [vmem:[%s560 + $0x18] sm:$0xff]
    %v565 = vmul.f32 %v45, %v561
    %v566 = vmul.f32 %v46, %v562
    %v567 = vmul.f32 %v47, %v563
    %v568 = vmul.f32 %v48, %v564
    %v569 = vmul.f32 %v49, %v561
    %v570 = vmul.f32 %v50, %v562
    %v571 = vmul.f32 %v51, %v563
    %v572 = vmul.f32 %v52, %v564
    %573 = vadd.xlane.f32.xlu0 %v565
    %v574 = vpop.xlane.xlu0 %573
    %575 = vadd.xlane.f32.xlu0 %v566
    %v576 = vpop.xlane.xlu0 %575
    %577 = vadd.xlane.f32.xlu0 %v567
    %v578 = vpop.xlane.xlu0 %577
    %579 = vadd.xlane.f32.xlu0 %v568
    %v580 = vpop.xlane.xlu0 %579
    %581 = vadd.xlane.f32.xlu0 %v569
    %v582 = vpop.xlane.xlu0 %581
    %583 = vadd.xlane.f32.xlu0 %v570
    %v584 = vpop.xlane.xlu0 %583
    %585 = vadd.xlane.f32.xlu0 %v571
    %v586 = vpop.xlane.xlu0 %585
    %587 = vadd.xlane.f32.xlu0 %v572
    %v588 = vpop.xlane.xlu0 %587
    %v589 = vadd.f32 %v488, %v574
    %v590 = vadd.f32 %v489, %v576
    %v591 = vadd.f32 %v490, %v578
    %v592 = vadd.f32 %v491, %v580
    %v593 = vadd.f32 %v492, %v582
    %v594 = vadd.f32 %v493, %v584
    %v595 = vadd.f32 %v494, %v586
    %v596 = vadd.f32 %v495, %v588
    %v597 = vsel %vm55, %v565, -inf
    %v598 = vsel %vm55, %v566, -inf
    %v599 = vsel %vm55, %v567, -inf
    %v600 = vsel %vm55, %v568, -inf
    %v601 = vsel %vm55, %v569, -inf
    %v602 = vsel %vm55, %v570, -inf
    %v603 = vsel %vm55, %v571, -inf
    %v604 = vsel %vm55, %v572, -inf
    %605 = vmax.xlane.f32.xlu0 %v597
    %v606 = vpop.xlane.xlu0 %605
    %607 = vmax.xlane.f32.xlu0 %v598
    %v608 = vpop.xlane.xlu0 %607
    %609 = vmax.xlane.f32.xlu0 %v599
    %v610 = vpop.xlane.xlu0 %609
    %611 = vmax.xlane.f32.xlu0 %v600
    %v612 = vpop.xlane.xlu0 %611
    %613 = vmax.xlane.f32.xlu0 %v601
    %v614 = vpop.xlane.xlu0 %613
    %615 = vmax.xlane.f32.xlu0 %v602
    %v616 = vpop.xlane.xlu0 %615
    %617 = vmax.xlane.f32.xlu0 %v603
    %v618 = vpop.xlane.xlu0 %617
    %619 = vmax.xlane.f32.xlu0 %v604
    %v620 = vpop.xlane.xlu0 %619
    %v621 = vadd.f32 %v520, %v606
    %v622 = vadd.f32 %v521, %v608
    %v623 = vadd.f32 %v522, %v610
    %v624 = vadd.f32 %v523, %v612
    %v625 = vadd.f32 %v524, %v614
    %v626 = vadd.f32 %v525, %v616
    %v627 = vadd.f32 %v526, %v618
    %v628 = vadd.f32 %v527, %v620
    %v629 = vsel %vm55, %v565, inf
    %v630 = vsel %vm55, %v566, inf
    %v631 = vsel %vm55, %v567, inf
    %v632 = vsel %vm55, %v568, inf
    %v633 = vsel %vm55, %v569, inf
    %v634 = vsel %vm55, %v570, inf
    %v635 = vsel %vm55, %v571, inf
    %v636 = vsel %vm55, %v572, inf
    %637 = vmin.xlane.f32.xlu0 %v629
    %v638 = vpop.xlane.xlu0 %637
    %639 = vmin.xlane.f32.xlu0 %v630
    %v640 = vpop.xlane.xlu0 %639
    %641 = vmin.xlane.f32.xlu0 %v631
    %v642 = vpop.xlane.xlu0 %641
    %643 = vmin.xlane.f32.xlu0 %v632
    %v644 = vpop.xlane.xlu0 %643
    %645 = vmin.xlane.f32.xlu0 %v633
    %v646 = vpop.xlane.xlu0 %645
    %647 = vmin.xlane.f32.xlu0 %v634
    %v648 = vpop.xlane.xlu0 %647
    %649 = vmin.xlane.f32.xlu0 %v635
    %v650 = vpop.xlane.xlu0 %649
    %651 = vmin.xlane.f32.xlu0 %v636
    %v652 = vpop.xlane.xlu0 %651
    %v653 = vadd.f32 %v552, %v638
    %v654 = vadd.f32 %v553, %v640
    %v655 = vadd.f32 %v554, %v642
    %v656 = vadd.f32 %v555, %v644
    %v657 = vadd.f32 %v556, %v646
    %v658 = vadd.f32 %v557, %v648
    %v659 = vadd.f32 %v558, %v650
    %v660 = vadd.f32 %v559, %v652
    %s661 = scalar_lea.vmem [#allocation4], 192
    %v662 = vld [vmem:[%s661] sm:$0xff]
    %v663 = vld [vmem:[%s661 + $0x8] sm:$0xff]
    %v664 = vld [vmem:[%s661 + $0x10] sm:$0xff]
    %v665 = vld [vmem:[%s661 + $0x18] sm:$0xff]
    %v666 = vmul.f32 %v45, %v662
    %v667 = vmul.f32 %v46, %v663
    %v668 = vmul.f32 %v47, %v664
    %v669 = vmul.f32 %v48, %v665
    %v670 = vmul.f32 %v49, %v662
    %v671 = vmul.f32 %v50, %v663
    %v672 = vmul.f32 %v51, %v664
    %v673 = vmul.f32 %v52, %v665
    %674 = vadd.xlane.f32.xlu0 %v666
    %v675 = vpop.xlane.xlu0 %674
    %676 = vadd.xlane.f32.xlu0 %v667
    %v677 = vpop.xlane.xlu0 %676
    %678 = vadd.xlane.f32.xlu0 %v668
    %v679 = vpop.xlane.xlu0 %678
    %680 = vadd.xlane.f32.xlu0 %v669
    %v681 = vpop.xlane.xlu0 %680
    %682 = vadd.xlane.f32.xlu0 %v670
    %v683 = vpop.xlane.xlu0 %682
    %684 = vadd.xlane.f32.xlu0 %v671
    %v685 = vpop.xlane.xlu0 %684
    %686 = vadd.xlane.f32.xlu0 %v672
    %v687 = vpop.xlane.xlu0 %686
    %688 = vadd.xlane.f32.xlu0 %v673
    %v689 = vpop.xlane.xlu0 %688
    %v690 = vadd.f32 %v589, %v675
    %v691 = vadd.f32 %v590, %v677
    %v692 = vadd.f32 %v591, %v679
    %v693 = vadd.f32 %v592, %v681
    %v694 = vadd.f32 %v593, %v683
    %v695 = vadd.f32 %v594, %v685
    %v696 = vadd.f32 %v595, %v687
    %v697 = vadd.f32 %v596, %v689
    %v698 = vsel %vm55, %v666, -inf
    %v699 = vsel %vm55, %v667, -inf
    %v700 = vsel %vm55, %v668, -inf
    %v701 = vsel %vm55, %v669, -inf
    %v702 = vsel %vm55, %v670, -inf
    %v703 = vsel %vm55, %v671, -inf
    %v704 = vsel %vm55, %v672, -inf
    %v705 = vsel %vm55, %v673, -inf
    %706 = vmax.xlane.f32.xlu0 %v698
    %v707 = vpop.xlane.xlu0 %706
    %708 = vmax.xlane.f32.xlu0 %v699
    %v709 = vpop.xlane.xlu0 %708
    %710 = vmax.xlane.f32.xlu0 %v700
    %v711 = vpop.xlane.xlu0 %710
    %712 = vmax.xlane.f32.xlu0 %v701
    %v713 = vpop.xlane.xlu0 %712
    %714 = vmax.xlane.f32.xlu0 %v702
    %v715 = vpop.xlane.xlu0 %714
    %716 = vmax.xlane.f32.xlu0 %v703
    %v717 = vpop.xlane.xlu0 %716
    %718 = vmax.xlane.f32.xlu0 %v704
    %v719 = vpop.xlane.xlu0 %718
    %720 = vmax.xlane.f32.xlu0 %v705
    %v721 = vpop.xlane.xlu0 %720
    %v722 = vadd.f32 %v621, %v707
    %v723 = vadd.f32 %v622, %v709
    %v724 = vadd.f32 %v623, %v711
    %v725 = vadd.f32 %v624, %v713
    %v726 = vadd.f32 %v625, %v715
    %v727 = vadd.f32 %v626, %v717
    %v728 = vadd.f32 %v627, %v719
    %v729 = vadd.f32 %v628, %v721
    %v730 = vsel %vm55, %v666, inf
    %v731 = vsel %vm55, %v667, inf
    %v732 = vsel %vm55, %v668, inf
    %v733 = vsel %vm55, %v669, inf
    %v734 = vsel %vm55, %v670, inf
    %v735 = vsel %vm55, %v671, inf
    %v736 = vsel %vm55, %v672, inf
    %v737 = vsel %vm55, %v673, inf
    %738 = vmin.xlane.f32.xlu0 %v730
    %v739 = vpop.xlane.xlu0 %738
    %740 = vmin.xlane.f32.xlu0 %v731
    %v741 = vpop.xlane.xlu0 %740
    %742 = vmin.xlane.f32.xlu0 %v732
    %v743 = vpop.xlane.xlu0 %742
    %744 = vmin.xlane.f32.xlu0 %v733
    %v745 = vpop.xlane.xlu0 %744
    %746 = vmin.xlane.f32.xlu0 %v734
    %v747 = vpop.xlane.xlu0 %746
    %748 = vmin.xlane.f32.xlu0 %v735
    %v749 = vpop.xlane.xlu0 %748
    %750 = vmin.xlane.f32.xlu0 %v736
    %v751 = vpop.xlane.xlu0 %750
    %752 = vmin.xlane.f32.xlu0 %v737
    %v753 = vpop.xlane.xlu0 %752
    %v754 = vadd.f32 %v653, %v739
    %v755 = vadd.f32 %v654, %v741
    %v756 = vadd.f32 %v655, %v743
    %v757 = vadd.f32 %v656, %v745
    %v758 = vadd.f32 %v657, %v747
    %v759 = vadd.f32 %v658, %v749
    %v760 = vadd.f32 %v659, %v751
    %v761 = vadd.f32 %v660, %v753
    %s762 = scalar_lea.vmem [#allocation4], 224
    %v763 = vld [vmem:[%s762] sm:$0xff]
    %v764 = vld [vmem:[%s762 + $0x8] sm:$0xff]
    %v765 = vld [vmem:[%s762 + $0x10] sm:$0xff]
    %v766 = vld [vmem:[%s762 + $0x18] sm:$0xff]
    %v767 = vmul.f32 %v45, %v763
    %v768 = vmul.f32 %v46, %v764
    %v769 = vmul.f32 %v47, %v765
    %v770 = vmul.f32 %v48, %v766
    %v771 = vmul.f32 %v49, %v763
    %v772 = vmul.f32 %v50, %v764
    %v773 = vmul.f32 %v51, %v765
    %v774 = vmul.f32 %v52, %v766
    %775 = vadd.xlane.f32.xlu0 %v767
    %v776 = vpop.xlane.xlu0 %775
    %777 = vadd.xlane.f32.xlu0 %v768
    %v778 = vpop.xlane.xlu0 %777
    %779 = vadd.xlane.f32.xlu0 %v769
    %v780 = vpop.xlane.xlu0 %779
    %781 = vadd.xlane.f32.xlu0 %v770
    %v782 = vpop.xlane.xlu0 %781
    %783 = vadd.xlane.f32.xlu0 %v771
    %v784 = vpop.xlane.xlu0 %783
    %785 = vadd.xlane.f32.xlu0 %v772
    %v786 = vpop.xlane.xlu0 %785
    %787 = vadd.xlane.f32.xlu0 %v773
    %v788 = vpop.xlane.xlu0 %787
    %789 = vadd.xlane.f32.xlu0 %v774
    %v790 = vpop.xlane.xlu0 %789
    %v791 = vadd.f32 %v690, %v776
    %v792 = vadd.f32 %v691, %v778
    %v793 = vadd.f32 %v692, %v780
    %v794 = vadd.f32 %v693, %v782
    %v795 = vadd.f32 %v694, %v784
    %v796 = vadd.f32 %v695, %v786
    %v797 = vadd.f32 %v696, %v788
    %v798 = vadd.f32 %v697, %v790
    %v799 = vsel %vm55, %v767, -inf
    %v800 = vsel %vm55, %v768, -inf
    %v801 = vsel %vm55, %v769, -inf
    %v802 = vsel %vm55, %v770, -inf
    %v803 = vsel %vm55, %v771, -inf
    %v804 = vsel %vm55, %v772, -inf
    %v805 = vsel %vm55, %v773, -inf
    %v806 = vsel %vm55, %v774, -inf
    %807 = vmax.xlane.f32.xlu0 %v799
    %v808 = vpop.xlane.xlu0 %807
    %809 = vmax.xlane.f32.xlu0 %v800
    %v810 = vpop.xlane.xlu0 %809
    %811 = vmax.xlane.f32.xlu0 %v801
    %v812 = vpop.xlane.xlu0 %811
    %813 = vmax.xlane.f32.xlu0 %v802
    %v814 = vpop.xlane.xlu0 %813
    %815 = vmax.xlane.f32.xlu0 %v803
    %v816 = vpop.xlane.xlu0 %815
    %817 = vmax.xlane.f32.xlu0 %v804
    %v818 = vpop.xlane.xlu0 %817
    %819 = vmax.xlane.f32.xlu0 %v805
    %v820 = vpop.xlane.xlu0 %819
    %821 = vmax.xlane.f32.xlu0 %v806
    %v822 = vpop.xlane.xlu0 %821
    %v823 = vadd.f32 %v722, %v808
    %v824 = vadd.f32 %v723, %v810
    %v825 = vadd.f32 %v724, %v812
    %v826 = vadd.f32 %v725, %v814
    %v827 = vadd.f32 %v726, %v816
    %v828 = vadd.f32 %v727, %v818
    %v829 = vadd.f32 %v728, %v820
    %v830 = vadd.f32 %v729, %v822
    %v831 = vsel %vm55, %v767, inf
    %v832 = vsel %vm55, %v768, inf
    %v833 = vsel %vm55, %v769, inf
    %v834 = vsel %vm55, %v770, inf
    %v835 = vsel %vm55, %v771, inf
    %v836 = vsel %vm55, %v772, inf
    %v837 = vsel %vm55, %v773, inf
    %v838 = vsel %vm55, %v774, inf
    %839 = vmin.xlane.f32.xlu0 %v831
    %v840 = vpop.xlane.xlu0 %839
    %841 = vmin.xlane.f32.xlu0 %v832
    %v842 = vpop.xlane.xlu0 %841
    %843 = vmin.xlane.f32.xlu0 %v833
    %v844 = vpop.xlane.xlu0 %843
    %845 = vmin.xlane.f32.xlu0 %v834
    %v846 = vpop.xlane.xlu0 %845
    %847 = vmin.xlane.f32.xlu0 %v835
    %v848 = vpop.xlane.xlu0 %847
    %849 = vmin.xlane.f32.xlu0 %v836
    %v850 = vpop.xlane.xlu0 %849
    %851 = vmin.xlane.f32.xlu0 %v837
    %v852 = vpop.xlane.xlu0 %851
    %853 = vmin.xlane.f32.xlu0 %v838
    %v854 = vpop.xlane.xlu0 %853
    %v855 = vadd.f32 %v754, %v840
    %v856 = vadd.f32 %v755, %v842
    %v857 = vadd.f32 %v756, %v844
    %v858 = vadd.f32 %v757, %v846
    %v859 = vadd.f32 %v758, %v848
    %v860 = vadd.f32 %v759, %v850
    %v861 = vadd.f32 %v760, %v852
    %v862 = vadd.f32 %v761, %v854
    %s863 = scalar_lea.vmem [#allocation4], 256
    %v864 = vld [vmem:[%s863] sm:$0xff]
    %v865 = vld [vmem:[%s863 + $0x8] sm:$0xff]
    %v866 = vld [vmem:[%s863 + $0x10] sm:$0xff]
    %v867 = vld [vmem:[%s863 + $0x18] sm:$0xff]
    %v868 = vmul.f32 %v45, %v864
    %v869 = vmul.f32 %v46, %v865
    %v870 = vmul.f32 %v47, %v866
    %v871 = vmul.f32 %v48, %v867
    %v872 = vmul.f32 %v49, %v864
    %v873 = vmul.f32 %v50, %v865
    %v874 = vmul.f32 %v51, %v866
    %v875 = vmul.f32 %v52, %v867
    %876 = vadd.xlane.f32.xlu0 %v868
    %v877 = vpop.xlane.xlu0 %876
    %878 = vadd.xlane.f32.xlu0 %v869
    %v879 = vpop.xlane.xlu0 %878
    %880 = vadd.xlane.f32.xlu0 %v870
    %v881 = vpop.xlane.xlu0 %880
    %882 = vadd.xlane.f32.xlu0 %v871
    %v883 = vpop.xlane.xlu0 %882
    %884 = vadd.xlane.f32.xlu0 %v872
    %v885 = vpop.xlane.xlu0 %884
    %886 = vadd.xlane.f32.xlu0 %v873
    %v887 = vpop.xlane.xlu0 %886
    %888 = vadd.xlane.f32.xlu0 %v874
    %v889 = vpop.xlane.xlu0 %888
    %890 = vadd.xlane.f32.xlu0 %v875
    %v891 = vpop.xlane.xlu0 %890
    %v892 = vadd.f32 %v791, %v877
    %v893 = vadd.f32 %v792, %v879
    %v894 = vadd.f32 %v793, %v881
    %v895 = vadd.f32 %v794, %v883
    %v896 = vadd.f32 %v795, %v885
    %v897 = vadd.f32 %v796, %v887
    %v898 = vadd.f32 %v797, %v889
    %v899 = vadd.f32 %v798, %v891
    %v900 = vsel %vm55, %v868, -inf
    %v901 = vsel %vm55, %v869, -inf
    %v902 = vsel %vm55, %v870, -inf
    %v903 = vsel %vm55, %v871, -inf
    %v904 = vsel %vm55, %v872, -inf
    %v905 = vsel %vm55, %v873, -inf
    %v906 = vsel %vm55, %v874, -inf
    %v907 = vsel %vm55, %v875, -inf
    %908 = vmax.xlane.f32.xlu0 %v900
    %v909 = vpop.xlane.xlu0 %908
    %910 = vmax.xlane.f32.xlu0 %v901
    %v911 = vpop.xlane.xlu0 %910
    %912 = vmax.xlane.f32.xlu0 %v902
    %v913 = vpop.xlane.xlu0 %912
    %914 = vmax.xlane.f32.xlu0 %v903
    %v915 = vpop.xlane.xlu0 %914
    %916 = vmax.xlane.f32.xlu0 %v904
    %v917 = vpop.xlane.xlu0 %916
    %918 = vmax.xlane.f32.xlu0 %v905
    %v919 = vpop.xlane.xlu0 %918
    %920 = vmax.xlane.f32.xlu0 %v906
    %v921 = vpop.xlane.xlu0 %920
    %922 = vmax.xlane.f32.xlu0 %v907
    %v923 = vpop.xlane.xlu0 %922
    %v924 = vadd.f32 %v823, %v909
    %v925 = vadd.f32 %v824, %v911
    %v926 = vadd.f32 %v825, %v913
    %v927 = vadd.f32 %v826, %v915
    %v928 = vadd.f32 %v827, %v917
    %v929 = vadd.f32 %v828, %v919
    %v930 = vadd.f32 %v829, %v921
    %v931 = vadd.f32 %v830, %v923
    %v932 = vsel %vm55, %v868, inf
    %v933 = vsel %vm55, %v869, inf
    %v934 = vsel %vm55, %v870, inf
    %v935 = vsel %vm55, %v871, inf
    %v936 = vsel %vm55, %v872, inf
    %v937 = vsel %vm55, %v873, inf
    %v938 = vsel %vm55, %v874, inf
    %v939 = vsel %vm55, %v875, inf
    %940 = vmin.xlane.f32.xlu0 %v932
    %v941 = vpop.xlane.xlu0 %940
    %942 = vmin.xlane.f32.xlu0 %v933
    %v943 = vpop.xlane.xlu0 %942
    %944 = vmin.xlane.f32.xlu0 %v934
    %v945 = vpop.xlane.xlu0 %944
    %946 = vmin.xlane.f32.xlu0 %v935
    %v947 = vpop.xlane.xlu0 %946
    %948 = vmin.xlane.f32.xlu0 %v936
    %v949 = vpop.xlane.xlu0 %948
    %950 = vmin.xlane.f32.xlu0 %v937
    %v951 = vpop.xlane.xlu0 %950
    %952 = vmin.xlane.f32.xlu0 %v938
    %v953 = vpop.xlane.xlu0 %952
    %954 = vmin.xlane.f32.xlu0 %v939
    %v955 = vpop.xlane.xlu0 %954
    %v956 = vadd.f32 %v855, %v941
    %v957 = vadd.f32 %v856, %v943
    %v958 = vadd.f32 %v857, %v945
    %v959 = vadd.f32 %v858, %v947
    %v960 = vadd.f32 %v859, %v949
    %v961 = vadd.f32 %v860, %v951
    %v962 = vadd.f32 %v861, %v953
    %v963 = vadd.f32 %v862, %v955
    %s964 = scalar_lea.vmem [#allocation4], 288
    %v965 = vld [vmem:[%s964] sm:$0xff]
    %v966 = vld [vmem:[%s964 + $0x8] sm:$0xff]
    %v967 = vld [vmem:[%s964 + $0x10] sm:$0xff]
    %v968 = vld [vmem:[%s964 + $0x18] sm:$0xff]
    %v969 = vmul.f32 %v45, %v965
    %v970 = vmul.f32 %v46, %v966
    %v971 = vmul.f32 %v47, %v967
    %v972 = vmul.f32 %v48, %v968
    %v973 = vmul.f32 %v49, %v965
    %v974 = vmul.f32 %v50, %v966
    %v975 = vmul.f32 %v51, %v967
    %v976 = vmul.f32 %v52, %v968
    %977 = vadd.xlane.f32.xlu0 %v969
    %v978 = vpop.xlane.xlu0 %977
    %979 = vadd.xlane.f32.xlu0 %v970
    %v980 = vpop.xlane.xlu0 %979
    %981 = vadd.xlane.f32.xlu0 %v971
    %v982 = vpop.xlane.xlu0 %981
    %983 = vadd.xlane.f32.xlu0 %v972
    %v984 = vpop.xlane.xlu0 %983
    %985 = vadd.xlane.f32.xlu0 %v973
    %v986 = vpop.xlane.xlu0 %985
    %987 = vadd.xlane.f32.xlu0 %v974
    %v988 = vpop.xlane.xlu0 %987
    %989 = vadd.xlane.f32.xlu0 %v975
    %v990 = vpop.xlane.xlu0 %989
    %991 = vadd.xlane.f32.xlu0 %v976
    %v992 = vpop.xlane.xlu0 %991
    %v993 = vadd.f32 %v892, %v978
    %v994 = vadd.f32 %v893, %v980
    %v995 = vadd.f32 %v894, %v982
    %v996 = vadd.f32 %v895, %v984
    %v997 = vadd.f32 %v896, %v986
    %v998 = vadd.f32 %v897, %v988
    %v999 = vadd.f32 %v898, %v990
    %v1000 = vadd.f32 %v899, %v992
    %v1001 = vsel %vm55, %v969, -inf
    %v1002 = vsel %vm55, %v970, -inf
    %v1003 = vsel %vm55, %v971, -inf
    %v1004 = vsel %vm55, %v972, -inf
    %v1005 = vsel %vm55, %v973, -inf
    %v1006 = vsel %vm55, %v974, -inf
    %v1007 = vsel %vm55, %v975, -inf
    %v1008 = vsel %vm55, %v976, -inf
    %1009 = vmax.xlane.f32.xlu0 %v1001
    %v1010 = vpop.xlane.xlu0 %1009
    %1011 = vmax.xlane.f32.xlu0 %v1002
    %v1012 = vpop.xlane.xlu0 %1011
    %1013 = vmax.xlane.f32.xlu0 %v1003
    %v1014 = vpop.xlane.xlu0 %1013
    %1015 = vmax.xlane.f32.xlu0 %v1004
    %v1016 = vpop.xlane.xlu0 %1015
    %1017 = vmax.xlane.f32.xlu0 %v1005
    %v1018 = vpop.xlane.xlu0 %1017
    %1019 = vmax.xlane.f32.xlu0 %v1006
    %v1020 = vpop.xlane.xlu0 %1019
    %1021 = vmax.xlane.f32.xlu0 %v1007
    %v1022 = vpop.xlane.xlu0 %1021
    %1023 = vmax.xlane.f32.xlu0 %v1008
    %v1024 = vpop.xlane.xlu0 %1023
    %v1025 = vadd.f32 %v924, %v1010
    %v1026 = vadd.f32 %v925, %v1012
    %v1027 = vadd.f32 %v926, %v1014
    %v1028 = vadd.f32 %v927, %v1016
    %v1029 = vadd.f32 %v928, %v1018
    %v1030 = vadd.f32 %v929, %v1020
    %v1031 = vadd.f32 %v930, %v1022
    %v1032 = vadd.f32 %v931, %v1024
    %v1033 = vsel %vm55, %v969, inf
    %v1034 = vsel %vm55, %v970, inf
    %v1035 = vsel %vm55, %v971, inf
    %v1036 = vsel %vm55, %v972, inf
    %v1037 = vsel %vm55, %v973, inf
    %v1038 = vsel %vm55, %v974, inf
    %v1039 = vsel %vm55, %v975, inf
    %v1040 = vsel %vm55, %v976, inf
    %1041 = vmin.xlane.f32.xlu0 %v1033
    %v1042 = vpop.xlane.xlu0 %1041
    %1043 = vmin.xlane.f32.xlu0 %v1034
    %v1044 = vpop.xlane.xlu0 %1043
    %1045 = vmin.xlane.f32.xlu0 %v1035
    %v1046 = vpop.xlane.xlu0 %1045
    %1047 = vmin.xlane.f32.xlu0 %v1036
    %v1048 = vpop.xlane.xlu0 %1047
    %1049 = vmin.xlane.f32.xlu0 %v1037
    %v1050 = vpop.xlane.xlu0 %1049
    %1051 = vmin.xlane.f32.xlu0 %v1038
    %v1052 = vpop.xlane.xlu0 %1051
    %1053 = vmin.xlane.f32.xlu0 %v1039
    %v1054 = vpop.xlane.xlu0 %1053
    %1055 = vmin.xlane.f32.xlu0 %v1040
    %v1056 = vpop.xlane.xlu0 %1055
    %v1057 = vadd.f32 %v956, %v1042
    %v1058 = vadd.f32 %v957, %v1044
    %v1059 = vadd.f32 %v958, %v1046
    %v1060 = vadd.f32 %v959, %v1048
    %v1061 = vadd.f32 %v960, %v1050
    %v1062 = vadd.f32 %v961, %v1052
    %v1063 = vadd.f32 %v962, %v1054
    %v1064 = vadd.f32 %v963, %v1056
    %s1065 = scalar_lea.vmem [#allocation4], 320
    %v1066 = vld [vmem:[%s1065] sm:$0xff]
    %v1067 = vld [vmem:[%s1065 + $0x8] sm:$0xff]
    %v1068 = vld [vmem:[%s1065 + $0x10] sm:$0xff]
    %v1069 = vld [vmem:[%s1065 + $0x18] sm:$0xff]
    %v1070 = vmul.f32 %v45, %v1066
    %v1071 = vmul.f32 %v46, %v1067
    %v1072 = vmul.f32 %v47, %v1068
    %v1073 = vmul.f32 %v48, %v1069
    %v1074 = vmul.f32 %v49, %v1066
    %v1075 = vmul.f32 %v50, %v1067
    %v1076 = vmul.f32 %v51, %v1068
    %v1077 = vmul.f32 %v52, %v1069
    %1078 = vadd.xlane.f32.xlu0 %v1070
    %v1079 = vpop.xlane.xlu0 %1078
    %1080 = vadd.xlane.f32.xlu0 %v1071
    %v1081 = vpop.xlane.xlu0 %1080
    %1082 = vadd.xlane.f32.xlu0 %v1072
    %v1083 = vpop.xlane.xlu0 %1082
    %1084 = vadd.xlane.f32.xlu0 %v1073
    %v1085 = vpop.xlane.xlu0 %1084
    %1086 = vadd.xlane.f32.xlu0 %v1074
    %v1087 = vpop.xlane.xlu0 %1086
    %1088 = vadd.xlane.f32.xlu0 %v1075
    %v1089 = vpop.xlane.xlu0 %1088
    %1090 = vadd.xlane.f32.xlu0 %v1076
    %v1091 = vpop.xlane.xlu0 %1090
    %1092 = vadd.xlane.f32.xlu0 %v1077
    %v1093 = vpop.xlane.xlu0 %1092
    %v1094 = vadd.f32 %v993, %v1079
    %v1095 = vadd.f32 %v994, %v1081
    %v1096 = vadd.f32 %v995, %v1083
    %v1097 = vadd.f32 %v996, %v1085
    %v1098 = vadd.f32 %v997, %v1087
    %v1099 = vadd.f32 %v998, %v1089
    %v1100 = vadd.f32 %v999, %v1091
    %v1101 = vadd.f32 %v1000, %v1093
    %v1102 = vsel %vm55, %v1070, -inf
    %v1103 = vsel %vm55, %v1071, -inf
    %v1104 = vsel %vm55, %v1072, -inf
    %v1105 = vsel %vm55, %v1073, -inf
    %v1106 = vsel %vm55, %v1074, -inf
    %v1107 = vsel %vm55, %v1075, -inf
    %v1108 = vsel %vm55, %v1076, -inf
    %v1109 = vsel %vm55, %v1077, -inf
    %1110 = vmax.xlane.f32.xlu0 %v1102
    %v1111 = vpop.xlane.xlu0 %1110
    %1112 = vmax.xlane.f32.xlu0 %v1103
    %v1113 = vpop.xlane.xlu0 %1112
    %1114 = vmax.xlane.f32.xlu0 %v1104
    %v1115 = vpop.xlane.xlu0 %1114
    %1116 = vmax.xlane.f32.xlu0 %v1105
    %v1117 = vpop.xlane.xlu0 %1116
    %1118 = vmax.xlane.f32.xlu0 %v1106
    %v1119 = vpop.xlane.xlu0 %1118
    %1120 = vmax.xlane.f32.xlu0 %v1107
    %v1121 = vpop.xlane.xlu0 %1120
    %1122 = vmax.xlane.f32.xlu0 %v1108
    %v1123 = vpop.xlane.xlu0 %1122
    %1124 = vmax.xlane.f32.xlu0 %v1109
    %v1125 = vpop.xlane.xlu0 %1124
    %v1126 = vadd.f32 %v1025, %v1111
    %v1127 = vadd.f32 %v1026, %v1113
    %v1128 = vadd.f32 %v1027, %v1115
    %v1129 = vadd.f32 %v1028, %v1117
    %v1130 = vadd.f32 %v1029, %v1119
    %v1131 = vadd.f32 %v1030, %v1121
    %v1132 = vadd.f32 %v1031, %v1123
    %v1133 = vadd.f32 %v1032, %v1125
    %v1134 = vsel %vm55, %v1070, inf
    %v1135 = vsel %vm55, %v1071, inf
    %v1136 = vsel %vm55, %v1072, inf
    %v1137 = vsel %vm55, %v1073, inf
    %v1138 = vsel %vm55, %v1074, inf
    %v1139 = vsel %vm55, %v1075, inf
    %v1140 = vsel %vm55, %v1076, inf
    %v1141 = vsel %vm55, %v1077, inf
    %1142 = vmin.xlane.f32.xlu0 %v1134
    %v1143 = vpop.xlane.xlu0 %1142
    %1144 = vmin.xlane.f32.xlu0 %v1135
    %v1145 = vpop.xlane.xlu0 %1144
    %1146 = vmin.xlane.f32.xlu0 %v1136
    %v1147 = vpop.xlane.xlu0 %1146
    %1148 = vmin.xlane.f32.xlu0 %v1137
    %v1149 = vpop.xlane.xlu0 %1148
    %1150 = vmin.xlane.f32.xlu0 %v1138
    %v1151 = vpop.xlane.xlu0 %1150
    %1152 = vmin.xlane.f32.xlu0 %v1139
    %v1153 = vpop.xlane.xlu0 %1152
    %1154 = vmin.xlane.f32.xlu0 %v1140
    %v1155 = vpop.xlane.xlu0 %1154
    %1156 = vmin.xlane.f32.xlu0 %v1141
    %v1157 = vpop.xlane.xlu0 %1156
    %v1158 = vadd.f32 %v1057, %v1143
    %v1159 = vadd.f32 %v1058, %v1145
    %v1160 = vadd.f32 %v1059, %v1147
    %v1161 = vadd.f32 %v1060, %v1149
    %v1162 = vadd.f32 %v1061, %v1151
    %v1163 = vadd.f32 %v1062, %v1153
    %v1164 = vadd.f32 %v1063, %v1155
    %v1165 = vadd.f32 %v1064, %v1157
    %s1166 = scalar_lea.vmem [#allocation4], 352
    %v1167 = vld [vmem:[%s1166] sm:$0xff]
    %v1168 = vld [vmem:[%s1166 + $0x8] sm:$0xff]
    %v1169 = vld [vmem:[%s1166 + $0x10] sm:$0xff]
    %v1170 = vld [vmem:[%s1166 + $0x18] sm:$0xff]
    %v1171 = vmul.f32 %v45, %v1167
    %v1172 = vmul.f32 %v46, %v1168
    %v1173 = vmul.f32 %v47, %v1169
    %v1174 = vmul.f32 %v48, %v1170
    %v1175 = vmul.f32 %v49, %v1167
    %v1176 = vmul.f32 %v50, %v1168
    %v1177 = vmul.f32 %v51, %v1169
    %v1178 = vmul.f32 %v52, %v1170
    %1179 = vadd.xlane.f32.xlu0 %v1171
    %v1180 = vpop.xlane.xlu0 %1179
    %1181 = vadd.xlane.f32.xlu0 %v1172
    %v1182 = vpop.xlane.xlu0 %1181
    %1183 = vadd.xlane.f32.xlu0 %v1173
    %v1184 = vpop.xlane.xlu0 %1183
    %1185 = vadd.xlane.f32.xlu0 %v1174
    %v1186 = vpop.xlane.xlu0 %1185
    %1187 = vadd.xlane.f32.xlu0 %v1175
    %v1188 = vpop.xlane.xlu0 %1187
    %1189 = vadd.xlane.f32.xlu0 %v1176
    %v1190 = vpop.xlane.xlu0 %1189
    %1191 = vadd.xlane.f32.xlu0 %v1177
    %v1192 = vpop.xlane.xlu0 %1191
    %1193 = vadd.xlane.f32.xlu0 %v1178
    %v1194 = vpop.xlane.xlu0 %1193
    %v1195 = vadd.f32 %v1094, %v1180
    %v1196 = vadd.f32 %v1095, %v1182
    %v1197 = vadd.f32 %v1096, %v1184
    %v1198 = vadd.f32 %v1097, %v1186
    %v1199 = vadd.f32 %v1098, %v1188
    %v1200 = vadd.f32 %v1099, %v1190
    %v1201 = vadd.f32 %v1100, %v1192
    %v1202 = vadd.f32 %v1101, %v1194
    %v1203 = vsel %vm55, %v1171, -inf
    %v1204 = vsel %vm55, %v1172, -inf
    %v1205 = vsel %vm55, %v1173, -inf
    %v1206 = vsel %vm55, %v1174, -inf
    %v1207 = vsel %vm55, %v1175, -inf
    %v1208 = vsel %vm55, %v1176, -inf
    %v1209 = vsel %vm55, %v1177, -inf
    %v1210 = vsel %vm55, %v1178, -inf
    %1211 = vmax.xlane.f32.xlu0 %v1203
    %v1212 = vpop.xlane.xlu0 %1211
    %1213 = vmax.xlane.f32.xlu0 %v1204
    %v1214 = vpop.xlane.xlu0 %1213
    %1215 = vmax.xlane.f32.xlu0 %v1205
    %v1216 = vpop.xlane.xlu0 %1215
    %1217 = vmax.xlane.f32.xlu0 %v1206
    %v1218 = vpop.xlane.xlu0 %1217
    %1219 = vmax.xlane.f32.xlu0 %v1207
    %v1220 = vpop.xlane.xlu0 %1219
    %1221 = vmax.xlane.f32.xlu0 %v1208
    %v1222 = vpop.xlane.xlu0 %1221
    %1223 = vmax.xlane.f32.xlu0 %v1209
    %v1224 = vpop.xlane.xlu0 %1223
    %1225 = vmax.xlane.f32.xlu0 %v1210
    %v1226 = vpop.xlane.xlu0 %1225
    %v1227 = vadd.f32 %v1126, %v1212
    %v1228 = vadd.f32 %v1127, %v1214
    %v1229 = vadd.f32 %v1128, %v1216
    %v1230 = vadd.f32 %v1129, %v1218
    %v1231 = vadd.f32 %v1130, %v1220
    %v1232 = vadd.f32 %v1131, %v1222
    %v1233 = vadd.f32 %v1132, %v1224
    %v1234 = vadd.f32 %v1133, %v1226
    %v1235 = vsel %vm55, %v1171, inf
    %v1236 = vsel %vm55, %v1172, inf
    %v1237 = vsel %vm55, %v1173, inf
    %v1238 = vsel %vm55, %v1174, inf
    %v1239 = vsel %vm55, %v1175, inf
    %v1240 = vsel %vm55, %v1176, inf
    %v1241 = vsel %vm55, %v1177, inf
    %v1242 = vsel %vm55, %v1178, inf
    %1243 = vmin.xlane.f32.xlu0 %v1235
    %v1244 = vpop.xlane.xlu0 %1243
    %1245 = vmin.xlane.f32.xlu0 %v1236
    %v1246 = vpop.xlane.xlu0 %1245
    %1247 = vmin.xlane.f32.xlu0 %v1237
    %v1248 = vpop.xlane.xlu0 %1247
    %1249 = vmin.xlane.f32.xlu0 %v1238
    %v1250 = vpop.xlane.xlu0 %1249
    %1251 = vmin.xlane.f32.xlu0 %v1239
    %v1252 = vpop.xlane.xlu0 %1251
    %1253 = vmin.xlane.f32.xlu0 %v1240
    %v1254 = vpop.xlane.xlu0 %1253
    %1255 = vmin.xlane.f32.xlu0 %v1241
    %v1256 = vpop.xlane.xlu0 %1255
    %1257 = vmin.xlane.f32.xlu0 %v1242
    %v1258 = vpop.xlane.xlu0 %1257
    %v1259 = vadd.f32 %v1158, %v1244
    %v1260 = vadd.f32 %v1159, %v1246
    %v1261 = vadd.f32 %v1160, %v1248
    %v1262 = vadd.f32 %v1161, %v1250
    %v1263 = vadd.f32 %v1162, %v1252
    %v1264 = vadd.f32 %v1163, %v1254
    %v1265 = vadd.f32 %v1164, %v1256
    %v1266 = vadd.f32 %v1165, %v1258
    %s1267 = scalar_lea.vmem [#allocation4], 384
    %v1268 = vld [vmem:[%s1267] sm:$0xff]
    %v1269 = vld [vmem:[%s1267 + $0x8] sm:$0xff]
    %v1270 = vld [vmem:[%s1267 + $0x10] sm:$0xff]
    %v1271 = vld [vmem:[%s1267 + $0x18] sm:$0xff]
    %v1272 = vmul.f32 %v45, %v1268
    %v1273 = vmul.f32 %v46, %v1269
    %v1274 = vmul.f32 %v47, %v1270
    %v1275 = vmul.f32 %v48, %v1271
    %v1276 = vmul.f32 %v49, %v1268
    %v1277 = vmul.f32 %v50, %v1269
    %v1278 = vmul.f32 %v51, %v1270
    %v1279 = vmul.f32 %v52, %v1271
    %1280 = vadd.xlane.f32.xlu0 %v1272
    %v1281 = vpop.xlane.xlu0 %1280
    %1282 = vadd.xlane.f32.xlu0 %v1273
    %v1283 = vpop.xlane.xlu0 %1282
    %1284 = vadd.xlane.f32.xlu0 %v1274
    %v1285 = vpop.xlane.xlu0 %1284
    %1286 = vadd.xlane.f32.xlu0 %v1275
    %v1287 = vpop.xlane.xlu0 %1286
    %1288 = vadd.xlane.f32.xlu0 %v1276
    %v1289 = vpop.xlane.xlu0 %1288
    %1290 = vadd.xlane.f32.xlu0 %v1277
    %v1291 = vpop.xlane.xlu0 %1290
    %1292 = vadd.xlane.f32.xlu0 %v1278
    %v1293 = vpop.xlane.xlu0 %1292
    %1294 = vadd.xlane.f32.xlu0 %v1279
    %v1295 = vpop.xlane.xlu0 %1294
    %v1296 = vadd.f32 %v1195, %v1281
    %v1297 = vadd.f32 %v1196, %v1283
    %v1298 = vadd.f32 %v1197, %v1285
    %v1299 = vadd.f32 %v1198, %v1287
    %v1300 = vadd.f32 %v1199, %v1289
    %v1301 = vadd.f32 %v1200, %v1291
    %v1302 = vadd.f32 %v1201, %v1293
    %v1303 = vadd.f32 %v1202, %v1295
    %v1304 = vsel %vm55, %v1272, -inf
    %v1305 = vsel %vm55, %v1273, -inf
    %v1306 = vsel %vm55, %v1274, -inf
    %v1307 = vsel %vm55, %v1275, -inf
    %v1308 = vsel %vm55, %v1276, -inf
    %v1309 = vsel %vm55, %v1277, -inf
    %v1310 = vsel %vm55, %v1278, -inf
    %v1311 = vsel %vm55, %v1279, -inf
    %1312 = vmax.xlane.f32.xlu0 %v1304
    %v1313 = vpop.xlane.xlu0 %1312
    %1314 = vmax.xlane.f32.xlu0 %v1305
    %v1315 = vpop.xlane.xlu0 %1314
    %1316 = vmax.xlane.f32.xlu0 %v1306
    %v1317 = vpop.xlane.xlu0 %1316
    %1318 = vmax.xlane.f32.xlu0 %v1307
    %v1319 = vpop.xlane.xlu0 %1318
    %1320 = vmax.xlane.f32.xlu0 %v1308
    %v1321 = vpop.xlane.xlu0 %1320
    %1322 = vmax.xlane.f32.xlu0 %v1309
    %v1323 = vpop.xlane.xlu0 %1322
    %1324 = vmax.xlane.f32.xlu0 %v1310
    %v1325 = vpop.xlane.xlu0 %1324
    %1326 = vmax.xlane.f32.xlu0 %v1311
    %v1327 = vpop.xlane.xlu0 %1326
    %v1328 = vadd.f32 %v1227, %v1313
    %v1329 = vadd.f32 %v1228, %v1315
    %v1330 = vadd.f32 %v1229, %v1317
    %v1331 = vadd.f32 %v1230, %v1319
    %v1332 = vadd.f32 %v1231, %v1321
    %v1333 = vadd.f32 %v1232, %v1323
    %v1334 = vadd.f32 %v1233, %v1325
    %v1335 = vadd.f32 %v1234, %v1327
    %v1336 = vsel %vm55, %v1272, inf
    %v1337 = vsel %vm55, %v1273, inf
    %v1338 = vsel %vm55, %v1274, inf
    %v1339 = vsel %vm55, %v1275, inf
    %v1340 = vsel %vm55, %v1276, inf
    %v1341 = vsel %vm55, %v1277, inf
    %v1342 = vsel %vm55, %v1278, inf
    %v1343 = vsel %vm55, %v1279, inf
    %1344 = vmin.xlane.f32.xlu0 %v1336
    %v1345 = vpop.xlane.xlu0 %1344
    %1346 = vmin.xlane.f32.xlu0 %v1337
    %v1347 = vpop.xlane.xlu0 %1346
    %1348 = vmin.xlane.f32.xlu0 %v1338
    %v1349 = vpop.xlane.xlu0 %1348
    %1350 = vmin.xlane.f32.xlu0 %v1339
    %v1351 = vpop.xlane.xlu0 %1350
    %1352 = vmin.xlane.f32.xlu0 %v1340
    %v1353 = vpop.xlane.xlu0 %1352
    %1354 = vmin.xlane.f32.xlu0 %v1341
    %v1355 = vpop.xlane.xlu0 %1354
    %1356 = vmin.xlane.f32.xlu0 %v1342
    %v1357 = vpop.xlane.xlu0 %1356
    %1358 = vmin.xlane.f32.xlu0 %v1343
    %v1359 = vpop.xlane.xlu0 %1358
    %v1360 = vadd.f32 %v1259, %v1345
    %v1361 = vadd.f32 %v1260, %v1347
    %v1362 = vadd.f32 %v1261, %v1349
    %v1363 = vadd.f32 %v1262, %v1351
    %v1364 = vadd.f32 %v1263, %v1353
    %v1365 = vadd.f32 %v1264, %v1355
    %v1366 = vadd.f32 %v1265, %v1357
    %v1367 = vadd.f32 %v1266, %v1359
    %s1368 = scalar_lea.vmem [#allocation4], 416
    %v1369 = vld [vmem:[%s1368] sm:$0xff]
    %v1370 = vld [vmem:[%s1368 + $0x8] sm:$0xff]
    %v1371 = vld [vmem:[%s1368 + $0x10] sm:$0xff]
    %v1372 = vld [vmem:[%s1368 + $0x18] sm:$0xff]
    %v1373 = vmul.f32 %v45, %v1369
    %v1374 = vmul.f32 %v46, %v1370
    %v1375 = vmul.f32 %v47, %v1371
    %v1376 = vmul.f32 %v48, %v1372
    %v1377 = vmul.f32 %v49, %v1369
    %v1378 = vmul.f32 %v50, %v1370
    %v1379 = vmul.f32 %v51, %v1371
    %v1380 = vmul.f32 %v52, %v1372
    %1381 = vadd.xlane.f32.xlu0 %v1373
    %v1382 = vpop.xlane.xlu0 %1381
    %1383 = vadd.xlane.f32.xlu0 %v1374
    %v1384 = vpop.xlane.xlu0 %1383
    %1385 = vadd.xlane.f32.xlu0 %v1375
    %v1386 = vpop.xlane.xlu0 %1385
    %1387 = vadd.xlane.f32.xlu0 %v1376
    %v1388 = vpop.xlane.xlu0 %1387
    %1389 = vadd.xlane.f32.xlu0 %v1377
    %v1390 = vpop.xlane.xlu0 %1389
    %1391 = vadd.xlane.f32.xlu0 %v1378
    %v1392 = vpop.xlane.xlu0 %1391
    %1393 = vadd.xlane.f32.xlu0 %v1379
    %v1394 = vpop.xlane.xlu0 %1393
    %1395 = vadd.xlane.f32.xlu0 %v1380
    %v1396 = vpop.xlane.xlu0 %1395
    %v1397 = vadd.f32 %v1296, %v1382
    %v1398 = vadd.f32 %v1297, %v1384
    %v1399 = vadd.f32 %v1298, %v1386
    %v1400 = vadd.f32 %v1299, %v1388
    %v1401 = vadd.f32 %v1300, %v1390
    %v1402 = vadd.f32 %v1301, %v1392
    %v1403 = vadd.f32 %v1302, %v1394
    %v1404 = vadd.f32 %v1303, %v1396
    %v1405 = vsel %vm55, %v1373, -inf
    %v1406 = vsel %vm55, %v1374, -inf
    %v1407 = vsel %vm55, %v1375, -inf
    %v1408 = vsel %vm55, %v1376, -inf
    %v1409 = vsel %vm55, %v1377, -inf
    %v1410 = vsel %vm55, %v1378, -inf
    %v1411 = vsel %vm55, %v1379, -inf
    %v1412 = vsel %vm55, %v1380, -inf
    %1413 = vmax.xlane.f32.xlu0 %v1405
    %v1414 = vpop.xlane.xlu0 %1413
    %1415 = vmax.xlane.f32.xlu0 %v1406
    %v1416 = vpop.xlane.xlu0 %1415
    %1417 = vmax.xlane.f32.xlu0 %v1407
    %v1418 = vpop.xlane.xlu0 %1417
    %1419 = vmax.xlane.f32.xlu0 %v1408
    %v1420 = vpop.xlane.xlu0 %1419
    %1421 = vmax.xlane.f32.xlu0 %v1409
    %v1422 = vpop.xlane.xlu0 %1421
    %1423 = vmax.xlane.f32.xlu0 %v1410
    %v1424 = vpop.xlane.xlu0 %1423
    %1425 = vmax.xlane.f32.xlu0 %v1411
    %v1426 = vpop.xlane.xlu0 %1425
    %1427 = vmax.xlane.f32.xlu0 %v1412
    %v1428 = vpop.xlane.xlu0 %1427
    %v1429 = vadd.f32 %v1328, %v1414
    %v1430 = vadd.f32 %v1329, %v1416
    %v1431 = vadd.f32 %v1330, %v1418
    %v1432 = vadd.f32 %v1331, %v1420
    %v1433 = vadd.f32 %v1332, %v1422
    %v1434 = vadd.f32 %v1333, %v1424
    %v1435 = vadd.f32 %v1334, %v1426
    %v1436 = vadd.f32 %v1335, %v1428
    %v1437 = vsel %vm55, %v1373, inf
    %v1438 = vsel %vm55, %v1374, inf
    %v1439 = vsel %vm55, %v1375, inf
    %v1440 = vsel %vm55, %v1376, inf
    %v1441 = vsel %vm55, %v1377, inf
    %v1442 = vsel %vm55, %v1378, inf
    %v1443 = vsel %vm55, %v1379, inf
    %v1444 = vsel %vm55, %v1380, inf
    %1445 = vmin.xlane.f32.xlu0 %v1437
    %v1446 = vpop.xlane.xlu0 %1445
    %1447 = vmin.xlane.f32.xlu0 %v1438
    %v1448 = vpop.xlane.xlu0 %1447
    %1449 = vmin.xlane.f32.xlu0 %v1439
    %v1450 = vpop.xlane.xlu0 %1449
    %1451 = vmin.xlane.f32.xlu0 %v1440
    %v1452 = vpop.xlane.xlu0 %1451
    %1453 = vmin.xlane.f32.xlu0 %v1441
    %v1454 = vpop.xlane.xlu0 %1453
    %1455 = vmin.xlane.f32.xlu0 %v1442
    %v1456 = vpop.xlane.xlu0 %1455
    %1457 = vmin.xlane.f32.xlu0 %v1443
    %v1458 = vpop.xlane.xlu0 %1457
    %1459 = vmin.xlane.f32.xlu0 %v1444
    %v1460 = vpop.xlane.xlu0 %1459
    %v1461 = vadd.f32 %v1360, %v1446
    %v1462 = vadd.f32 %v1361, %v1448
    %v1463 = vadd.f32 %v1362, %v1450
    %v1464 = vadd.f32 %v1363, %v1452
    %v1465 = vadd.f32 %v1364, %v1454
    %v1466 = vadd.f32 %v1365, %v1456
    %v1467 = vadd.f32 %v1366, %v1458
    %v1468 = vadd.f32 %v1367, %v1460
    %s1469 = scalar_lea.vmem [#allocation4], 448
    %v1470 = vld [vmem:[%s1469] sm:$0xff]
    %v1471 = vld [vmem:[%s1469 + $0x8] sm:$0xff]
    %v1472 = vld [vmem:[%s1469 + $0x10] sm:$0xff]
    %v1473 = vld [vmem:[%s1469 + $0x18] sm:$0xff]
    %v1474 = vmul.f32 %v45, %v1470
    %v1475 = vmul.f32 %v46, %v1471
    %v1476 = vmul.f32 %v47, %v1472
    %v1477 = vmul.f32 %v48, %v1473
    %v1478 = vmul.f32 %v49, %v1470
    %v1479 = vmul.f32 %v50, %v1471
    %v1480 = vmul.f32 %v51, %v1472
    %v1481 = vmul.f32 %v52, %v1473
    %1482 = vadd.xlane.f32.xlu0 %v1474
    %v1483 = vpop.xlane.xlu0 %1482
    %1484 = vadd.xlane.f32.xlu0 %v1475
    %v1485 = vpop.xlane.xlu0 %1484
    %1486 = vadd.xlane.f32.xlu0 %v1476
    %v1487 = vpop.xlane.xlu0 %1486
    %1488 = vadd.xlane.f32.xlu0 %v1477
    %v1489 = vpop.xlane.xlu0 %1488
    %1490 = vadd.xlane.f32.xlu0 %v1478
    %v1491 = vpop.xlane.xlu0 %1490
    %1492 = vadd.xlane.f32.xlu0 %v1479
    %v1493 = vpop.xlane.xlu0 %1492
    %1494 = vadd.xlane.f32.xlu0 %v1480
    %v1495 = vpop.xlane.xlu0 %1494
    %1496 = vadd.xlane.f32.xlu0 %v1481
    %v1497 = vpop.xlane.xlu0 %1496
    %v1498 = vadd.f32 %v1397, %v1483
    %v1499 = vadd.f32 %v1398, %v1485
    %v1500 = vadd.f32 %v1399, %v1487
    %v1501 = vadd.f32 %v1400, %v1489
    %v1502 = vadd.f32 %v1401, %v1491
    %v1503 = vadd.f32 %v1402, %v1493
    %v1504 = vadd.f32 %v1403, %v1495
    %v1505 = vadd.f32 %v1404, %v1497
    %v1506 = vsel %vm55, %v1474, -inf
    %v1507 = vsel %vm55, %v1475, -inf
    %v1508 = vsel %vm55, %v1476, -inf
    %v1509 = vsel %vm55, %v1477, -inf
    %v1510 = vsel %vm55, %v1478, -inf
    %v1511 = vsel %vm55, %v1479, -inf
    %v1512 = vsel %vm55, %v1480, -inf
    %v1513 = vsel %vm55, %v1481, -inf
    %1514 = vmax.xlane.f32.xlu0 %v1506
    %v1515 = vpop.xlane.xlu0 %1514
    %1516 = vmax.xlane.f32.xlu0 %v1507
    %v1517 = vpop.xlane.xlu0 %1516
    %1518 = vmax.xlane.f32.xlu0 %v1508
    %v1519 = vpop.xlane.xlu0 %1518
    %1520 = vmax.xlane.f32.xlu0 %v1509
    %v1521 = vpop.xlane.xlu0 %1520
    %1522 = vmax.xlane.f32.xlu0 %v1510
    %v1523 = vpop.xlane.xlu0 %1522
    %1524 = vmax.xlane.f32.xlu0 %v1511
    %v1525 = vpop.xlane.xlu0 %1524
    %1526 = vmax.xlane.f32.xlu0 %v1512
    %v1527 = vpop.xlane.xlu0 %1526
    %1528 = vmax.xlane.f32.xlu0 %v1513
    %v1529 = vpop.xlane.xlu0 %1528
    %v1530 = vadd.f32 %v1429, %v1515
    %v1531 = vadd.f32 %v1430, %v1517
    %v1532 = vadd.f32 %v1431, %v1519
    %v1533 = vadd.f32 %v1432, %v1521
    %v1534 = vadd.f32 %v1433, %v1523
    %v1535 = vadd.f32 %v1434, %v1525
    %v1536 = vadd.f32 %v1435, %v1527
    %v1537 = vadd.f32 %v1436, %v1529
    %v1538 = vsel %vm55, %v1474, inf
    %v1539 = vsel %vm55, %v1475, inf
    %v1540 = vsel %vm55, %v1476, inf
    %v1541 = vsel %vm55, %v1477, inf
    %v1542 = vsel %vm55, %v1478, inf
    %v1543 = vsel %vm55, %v1479, inf
    %v1544 = vsel %vm55, %v1480, inf
    %v1545 = vsel %vm55, %v1481, inf
    %1546 = vmin.xlane.f32.xlu0 %v1538
    %v1547 = vpop.xlane.xlu0 %1546
    %1548 = vmin.xlane.f32.xlu0 %v1539
    %v1549 = vpop.xlane.xlu0 %1548
    %1550 = vmin.xlane.f32.xlu0 %v1540
    %v1551 = vpop.xlane.xlu0 %1550
    %1552 = vmin.xlane.f32.xlu0 %v1541
    %v1553 = vpop.xlane.xlu0 %1552
    %1554 = vmin.xlane.f32.xlu0 %v1542
    %v1555 = vpop.xlane.xlu0 %1554
    %1556 = vmin.xlane.f32.xlu0 %v1543
    %v1557 = vpop.xlane.xlu0 %1556
    %1558 = vmin.xlane.f32.xlu0 %v1544
    %v1559 = vpop.xlane.xlu0 %1558
    %1560 = vmin.xlane.f32.xlu0 %v1545
    %v1561 = vpop.xlane.xlu0 %1560
    %v1562 = vadd.f32 %v1461, %v1547
    %v1563 = vadd.f32 %v1462, %v1549
    %v1564 = vadd.f32 %v1463, %v1551
    %v1565 = vadd.f32 %v1464, %v1553
    %v1566 = vadd.f32 %v1465, %v1555
    %v1567 = vadd.f32 %v1466, %v1557
    %v1568 = vadd.f32 %v1467, %v1559
    %v1569 = vadd.f32 %v1468, %v1561
    %s1570 = scalar_lea.vmem [#allocation4], 480
    %v1571 = vld [vmem:[%s1570] sm:$0xff]
    %v1572 = vld [vmem:[%s1570 + $0x8] sm:$0xff]
    %v1573 = vld [vmem:[%s1570 + $0x10] sm:$0xff]
    %v1574 = vld [vmem:[%s1570 + $0x18] sm:$0xff]
    %v1575 = vmul.f32 %v45, %v1571
    %v1576 = vmul.f32 %v46, %v1572
    %v1577 = vmul.f32 %v47, %v1573
    %v1578 = vmul.f32 %v48, %v1574
    %v1579 = vmul.f32 %v49, %v1571
    %v1580 = vmul.f32 %v50, %v1572
    %v1581 = vmul.f32 %v51, %v1573
    %v1582 = vmul.f32 %v52, %v1574
    %1583 = vadd.xlane.f32.xlu0 %v1575
    %v1584 = vpop.xlane.xlu0 %1583
    %1585 = vadd.xlane.f32.xlu0 %v1576
    %v1586 = vpop.xlane.xlu0 %1585
    %1587 = vadd.xlane.f32.xlu0 %v1577
    %v1588 = vpop.xlane.xlu0 %1587
    %1589 = vadd.xlane.f32.xlu0 %v1578
    %v1590 = vpop.xlane.xlu0 %1589
    %1591 = vadd.xlane.f32.xlu0 %v1579
    %v1592 = vpop.xlane.xlu0 %1591
    %1593 = vadd.xlane.f32.xlu0 %v1580
    %v1594 = vpop.xlane.xlu0 %1593
    %1595 = vadd.xlane.f32.xlu0 %v1581
    %v1596 = vpop.xlane.xlu0 %1595
    %1597 = vadd.xlane.f32.xlu0 %v1582
    %v1598 = vpop.xlane.xlu0 %1597
    %v1599 = vadd.f32 %v1498, %v1584
    %v1600 = vadd.f32 %v1499, %v1586
    %v1601 = vadd.f32 %v1500, %v1588
    %v1602 = vadd.f32 %v1501, %v1590
    %v1603 = vadd.f32 %v1502, %v1592
    %v1604 = vadd.f32 %v1503, %v1594
    %v1605 = vadd.f32 %v1504, %v1596
    %v1606 = vadd.f32 %v1505, %v1598
    %v1607 = vsel %vm55, %v1575, -inf
    %v1608 = vsel %vm55, %v1576, -inf
    %v1609 = vsel %vm55, %v1577, -inf
    %v1610 = vsel %vm55, %v1578, -inf
    %v1611 = vsel %vm55, %v1579, -inf
    %v1612 = vsel %vm55, %v1580, -inf
    %v1613 = vsel %vm55, %v1581, -inf
    %v1614 = vsel %vm55, %v1582, -inf
    %1615 = vmax.xlane.f32.xlu0 %v1607
    %v1616 = vpop.xlane.xlu0 %1615
    %1617 = vmax.xlane.f32.xlu0 %v1608
    %v1618 = vpop.xlane.xlu0 %1617
    %1619 = vmax.xlane.f32.xlu0 %v1609
    %v1620 = vpop.xlane.xlu0 %1619
    %1621 = vmax.xlane.f32.xlu0 %v1610
    %v1622 = vpop.xlane.xlu0 %1621
    %1623 = vmax.xlane.f32.xlu0 %v1611
    %v1624 = vpop.xlane.xlu0 %1623
    %1625 = vmax.xlane.f32.xlu0 %v1612
    %v1626 = vpop.xlane.xlu0 %1625
    %1627 = vmax.xlane.f32.xlu0 %v1613
    %v1628 = vpop.xlane.xlu0 %1627
    %1629 = vmax.xlane.f32.xlu0 %v1614
    %v1630 = vpop.xlane.xlu0 %1629
    %v1631 = vadd.f32 %v1530, %v1616
    %v1632 = vadd.f32 %v1531, %v1618
    %v1633 = vadd.f32 %v1532, %v1620
    %v1634 = vadd.f32 %v1533, %v1622
    %v1635 = vadd.f32 %v1534, %v1624
    %v1636 = vadd.f32 %v1535, %v1626
    %v1637 = vadd.f32 %v1536, %v1628
    %v1638 = vadd.f32 %v1537, %v1630
    %v1639 = vsel %vm55, %v1575, inf
    %v1640 = vsel %vm55, %v1576, inf
    %v1641 = vsel %vm55, %v1577, inf
    %v1642 = vsel %vm55, %v1578, inf
    %v1643 = vsel %vm55, %v1579, inf
    %v1644 = vsel %vm55, %v1580, inf
    %v1645 = vsel %vm55, %v1581, inf
    %v1646 = vsel %vm55, %v1582, inf
    %1647 = vmin.xlane.f32.xlu0 %v1639
    %v1648 = vpop.xlane.xlu0 %1647
    %1649 = vmin.xlane.f32.xlu0 %v1640
    %v1650 = vpop.xlane.xlu0 %1649
    %1651 = vmin.xlane.f32.xlu0 %v1641
    %v1652 = vpop.xlane.xlu0 %1651
    %1653 = vmin.xlane.f32.xlu0 %v1642
    %v1654 = vpop.xlane.xlu0 %1653
    %1655 = vmin.xlane.f32.xlu0 %v1643
    %v1656 = vpop.xlane.xlu0 %1655
    %1657 = vmin.xlane.f32.xlu0 %v1644
    %v1658 = vpop.xlane.xlu0 %1657
    %1659 = vmin.xlane.f32.xlu0 %v1645
    %v1660 = vpop.xlane.xlu0 %1659
    %1661 = vmin.xlane.f32.xlu0 %v1646
    %v1662 = vpop.xlane.xlu0 %1661
    %v1663 = vadd.f32 %v1562, %v1648
    %v1664 = vadd.f32 %v1563, %v1650
    %v1665 = vadd.f32 %v1564, %v1652
    %v1666 = vadd.f32 %v1565, %v1654
    %v1667 = vadd.f32 %v1566, %v1656
    %v1668 = vadd.f32 %v1567, %v1658
    %v1669 = vadd.f32 %v1568, %v1660
    %v1670 = vadd.f32 %v1569, %v1662
    %v1671 = vmul.f32 %v1599, 0.0012755102
    %v1672 = vmul.f32 %v1600, 0.0012755102
    %v1673 = vmul.f32 %v1601, 0.0012755102
    %v1674 = vmul.f32 %v1602, 0.0012755102
    %v1675 = vmul.f32 %v1603, 0.0012755102
    %v1676 = vmul.f32 %v1604, 0.0012755102
    %v1677 = vmul.f32 %v1605, 0.0012755102
    %v1678 = vmul.f32 %v1606, 0.0012755102
    %v1679 = vmul.f32 %v1631, 0.0625
    %v1680 = vmul.f32 %v1632, 0.0625
    %v1681 = vmul.f32 %v1633, 0.0625
    %v1682 = vmul.f32 %v1634, 0.0625
    %v1683 = vmul.f32 %v1635, 0.0625
    %v1684 = vmul.f32 %v1636, 0.0625
    %v1685 = vmul.f32 %v1637, 0.0625
    %v1686 = vmul.f32 %v1638, 0.0625
    %v1687 = vmul.f32 %v1663, 0.0625
    %v1688 = vmul.f32 %v1664, 0.0625
    %v1689 = vmul.f32 %v1665, 0.0625
    %v1690 = vmul.f32 %v1666, 0.0625
    %v1691 = vmul.f32 %v1667, 0.0625
    %v1692 = vmul.f32 %v1668, 0.0625
    %v1693 = vmul.f32 %v1669, 0.0625
    %v1694 = vmul.f32 %v1670, 0.0625
    %vm1695 = vcmask 7168
    %v1696 = vsel %vm1695, %v1671, %v1675
    %v1697 = vsel %vm1695, %v1672, %v1676
    %v1698 = vsel %vm1695, %v1673, %v1677
    %v1699 = vsel %vm1695, %v1674, %v1678
    %vm1700 = vcmask 15360
    %v1701 = vsel %vm1700, %v1696, %v1679
    %v1702 = vsel %vm1700, %v1697, %v1680
    %v1703 = vsel %vm1700, %v1698, %v1681
    %v1704 = vsel %vm1700, %v1699, %v1682
    %vm1705 = vcmask 23552
    %v1706 = vsel %vm1705, %v1701, %v1683
    %v1707 = vsel %vm1705, %v1702, %v1684
    %v1708 = vsel %vm1705, %v1703, %v1685
    %v1709 = vsel %vm1705, %v1704, %v1686
    %vm1710 = vcmask 31744
    %v1711 = vsel %vm1710, %v1706, %v1687
    %v1712 = vsel %vm1710, %v1707, %v1688
    %v1713 = vsel %vm1710, %v1708, %v1689
    %v1714 = vsel %vm1710, %v1709, %v1690
    %vm1715 = vcmask 39936
    %v1716 = vsel %vm1715, %v1711, %v1691
    %v1717 = vsel %vm1715, %v1712, %v1692
    %v1718 = vsel %vm1715, %v1713, %v1693
    %v1719 = vsel %vm1715, %v1714, %v1694
    %v1720 = vld [vmem:[%s2] sm:$0x3]
    %vm1721 = vcmask 261120
    %v1723 = vsel %vm1721, %v1720, 0
    %1725 = vmatprep.subr.mxu0 0.0
    %1726 = vmatpush1.msra.mxu0 %v1716
    %1727 = vmatprep.subr.mxu0 0.0
    %1728 = vmatpush1.msra.mxu0 %v1717
    %1729 = vmatprep.subr.mxu0 0.0
    %1730 = vmatpush1.msra.mxu0 %v1718
    %1731 = vmatprep.subr.mxu0 0.0
    %1732 = vmatpush1.msra.mxu0 %v1719
    %1733 = vmatprep.subr.mxu0 0.0
    %1734 = vmatpush1.msra.mxu0 0.0
    %1735 = vmatprep.subr.mxu0 0.0
    %1736 = vmatpush1.msra.mxu0 0.0
    %1737 = vmatprep.subr.mxu0 0.0
    %1738 = vmatpush1.msra.mxu0 0.0
    %1739 = vmatprep.subr.mxu0 0.0
    %1740 = vmatpush1.msra.mxu0 0.0
    %1741 = vmatprep.subr.mxu0 0.0
    %1742 = vmatpush1.msra.mxu0 0.0
    %1743 = vmatprep.subr.mxu0 0.0
    %1744 = vmatpush1.msra.mxu0 0.0
    %1745 = vmatprep.subr.mxu0 0.0
    %1746 = vmatpush1.msra.mxu0 0.0
    %1747 = vmatprep.subr.mxu0 0.0
    %1748 = vmatpush1.msra.mxu0 0.0
    %1749 = vmatprep.subr.mxu0 0.0
    %1750 = vmatpush1.msra.mxu0 0.0
    %1751 = vmatprep.subr.mxu0 0.0
    %1752 = vmatpush1.msra.mxu0 0.0
    %1753 = vmatprep.subr.mxu0 0.0
    %1754 = vmatpush1.msra.mxu0 0.0
    %1755 = vmatprep.subr.mxu0 0.0
    %1756 = vmatpush1.msra.mxu0 0.0
    %1757 = vmatprep.subr.mxu0 0.0
    %1758 = vmatpush1.msra.mxu0 0.0
    %1759 = vmatprep.subr.mxu0 0.0
    %1760 = vmatpush1.msra.mxu0 0.0
    %1761 = vmatprep.subr.mxu0 0.0
    %1762 = vmatpush1.msra.mxu0 0.0
    %1763 = vmatprep.subr.mxu0 0.0
    %1764 = vmatpush1.msra.mxu0 0.0
    %1765 = vmatprep.subr.mxu0 0.0
    %1766 = vmatpush1.msra.mxu0 0.0
    %1767 = vmatprep.subr.mxu0 0.0
    %1768 = vmatpush1.msra.mxu0 0.0
    %1769 = vmatprep.subr.mxu0 0.0
    %1770 = vmatpush1.msra.mxu0 0.0
    %1771 = vmatprep.subr.mxu0 0.0
    %1772 = vmatpush1.msra.mxu0 0.0
    %1773 = vmatprep.subr.mxu0 0.0
    %1774 = vmatpush1.msra.mxu0 0.0
    %1775 = vmatprep.subr.mxu0 0.0
    %1776 = vmatpush1.msra.mxu0 0.0
    %1777 = vmatprep.subr.mxu0 0.0
    %1778 = vmatpush1.msra.mxu0 0.0
    %1779 = vmatprep.subr.mxu0 0.0
    %1780 = vmatpush1.msra.mxu0 0.0
    %1781 = vmatprep.subr.mxu0 0.0
    %1782 = vmatpush1.msra.mxu0 0.0
    %1783 = vmatprep.subr.mxu0 0.0
    %1784 = vmatpush1.msra.mxu0 0.0
    %1785 = vmatprep.subr.mxu0 0.0
    %1786 = vmatpush1.msra.mxu0 0.0
    %1787 = vmatprep.subr.mxu0 0.0
    %1788 = vmatpush1.msra.mxu0 0.0
    %1789 = vmatprep.mubr.f32.mxu0 0.0
    %1790 = vmatmul.mubr.f32.gmra.mrb[0].mxu0 %v1723
    %v1791 = vpop.f32.mrb[0].mxu0
    %v1792 = vadd.f32 0.0, %v1791
    %v1793 = vpop.f32.mrb[0].mxu0
    %1794 = vdwg.mxu0
    %v1795 = vmax.f32 %v1792, 0.0
    %v1796 = vld [vmem:[%s3] sm:$0xff]
    %v1797 = vld [vmem:[%s3 + $0x8] sm:$0xff]
    %v1798 = vld [vmem:[%s3 + $0x10] sm:$0xff]
    %v1799 = vld [vmem:[%s3 + $0x18] sm:$0xff]
    %v1801 = vsel %vm1700, %v1796, 0
    %v1804 = vsel %vm1700, %v1797, 0
    %v1807 = vsel %vm1700, %v1798, 0
    %v1810 = vsel %vm1700, %v1799, 0
    %vm1812 = vcmask 1041408
    %v1814 = vsel %vm1812, %v1795, 0
    %1816 = vmatprep.subr.mxu0 0.0
    %1817 = vmatpush1.msra.mxu0 %v1814
    %1818 = vmatprep.subr.mxu0 0.0
    %1819 = vmatpush1.msra.mxu0 0.0
    %1820 = vmatprep.subr.mxu0 0.0
    %1821 = vmatpush1.msra.mxu0 0.0
    %1822 = vmatprep.subr.mxu0 0.0
    %1823 = vmatpush1.msra.mxu0 0.0
    %1824 = vmatprep.subr.mxu0 0.0
    %1825 = vmatpush1.msra.mxu0 0.0
    %1826 = vmatprep.subr.mxu0 0.0
    %1827 = vmatpush1.msra.mxu0 0.0
    %1828 = vmatprep.subr.mxu0 0.0
    %1829 = vmatpush1.msra.mxu0 0.0
    %1830 = vmatprep.subr.mxu0 0.0
    %1831 = vmatpush1.msra.mxu0 0.0
    %1832 = vmatprep.subr.mxu0 0.0
    %1833 = vmatpush1.msra.mxu0 0.0
    %1834 = vmatprep.subr.mxu0 0.0
    %1835 = vmatpush1.msra.mxu0 0.0
    %1836 = vmatprep.subr.mxu0 0.0
    %1837 = vmatpush1.msra.mxu0 0.0
    %1838 = vmatprep.subr.mxu0 0.0
    %1839 = vmatpush1.msra.mxu0 0.0
    %1840 = vmatprep.subr.mxu0 0.0
    %1841 = vmatpush1.msra.mxu0 0.0
    %1842 = vmatprep.subr.mxu0 0.0
    %1843 = vmatpush1.msra.mxu0 0.0
    %1844 = vmatprep.subr.mxu0 0.0
    %1845 = vmatpush1.msra.mxu0 0.0
    %1846 = vmatprep.subr.mxu0 0.0
    %1847 = vmatpush1.msra.mxu0 0.0
    %1848 = vmatprep.subr.mxu0 0.0
    %1849 = vmatpush1.msra.mxu0 0.0
    %1850 = vmatprep.subr.mxu0 0.0
    %1851 = vmatpush1.msra.mxu0 0.0
    %1852 = vmatprep.subr.mxu0 0.0
    %1853 = vmatpush1.msra.mxu0 0.0
    %1854 = vmatprep.subr.mxu0 0.0
    %1855 = vmatpush1.msra.mxu0 0.0
    %1856 = vmatprep.subr.mxu0 0.0
    %1857 = vmatpush1.msra.mxu0 0.0
    %1858 = vmatprep.subr.mxu0 0.0
    %1859 = vmatpush1.msra.mxu0 0.0
    %1860 = vmatprep.subr.mxu0 0.0
    %1861 = vmatpush1.msra.mxu0 0.0
    %1862 = vmatprep.subr.mxu0 0.0
    %1863 = vmatpush1.msra.mxu0 0.0
    %1864 = vmatprep.subr.mxu0 0.0
    %1865 = vmatpush1.msra.mxu0 0.0
    %1866 = vmatprep.subr.mxu0 0.0
    %1867 = vmatpush1.msra.mxu0 0.0
    %1868 = vmatprep.subr.mxu0 0.0
    %1869 = vmatpush1.msra.mxu0 0.0
    %1870 = vmatprep.subr.mxu0 0.0
    %1871 = vmatpush1.msra.mxu0 0.0
    %1872 = vmatprep.subr.mxu0 0.0
    %1873 = vmatpush1.msra.mxu0 0.0
    %1874 = vmatprep.subr.mxu0 0.0
    %1875 = vmatpush1.msra.mxu0 0.0
    %1876 = vmatprep.subr.mxu0 0.0
    %1877 = vmatpush1.msra.mxu0 0.0
    %1878 = vmatprep.subr.mxu0 0.0
    %1879 = vmatpush1.msra.mxu0 0.0
    %1880 = vmatprep.mubr.f32.mxu0 0.0
    %1881 = vmatmul.mubr.f32.gmra.mrb[0].mxu0 %v1801
    %v1882 = vpop.f32.mrb[0].mxu0
    %v1883 = vadd.f32 0.0, %v1882
    %v1884 = vpop.f32.mrb[0].mxu0
    %1885 = vmatprep.mubr.f32.mxu0 0.0
    %1886 = vmatmul.mubr.f32.gmra.mrb[0].mxu0 %v1804
    %v1887 = vpop.f32.mrb[0].mxu0
    %v1888 = vadd.f32 0.0, %v1887
    %v1889 = vpop.f32.mrb[0].mxu0
    %1890 = vmatprep.mubr.f32.mxu0 0.0
    %1891 = vmatmul.mubr.f32.gmra.mrb[0].mxu0 %v1807
    %v1892 = vpop.f32.mrb[0].mxu0
    %v1893 = vadd.f32 0.0, %v1892
    %v1894 = vpop.f32.mrb[0].mxu0
    %1895 = vmatprep.mubr.f32.mxu0 0.0
    %1896 = vmatmul.mubr.f32.gmra.mrb[0].mxu0 %v1810
    %v1897 = vpop.f32.mrb[0].mxu0
    %v1898 = vadd.f32 0.0, %v1897
    %v1899 = vpop.f32.mrb[0].mxu0
    %1900 = vdwg.mxu0
    %1905 = vrot.lane.b32.xlu0 %v1883, 126
    %v1906 = vpop.permute.xlu0 %1905
    %1907 = vrot.lane.b32.xlu0 %v1888, 126
    %v1908 = vpop.permute.xlu0 %1907
    %1909 = vrot.lane.b32.xlu0 %v1893, 126
    %v1910 = vpop.permute.xlu0 %1909
    %1911 = vrot.lane.b32.xlu0 %v1898, 126
    %v1912 = vpop.permute.xlu0 %1911
    %v1917 = vadd.f32 %v1883, %v1906
    %v1918 = vadd.f32 %v1888, %v1908
    %v1919 = vadd.f32 %v1893, %v1910
    %v1920 = vadd.f32 %v1898, %v1912
    %1921 = vrot.lane.b32.xlu0 %v1883, 124
    %v1922 = vpop.permute.xlu0 %1921
    %1923 = vrot.lane.b32.xlu0 %v1888, 124
    %v1924 = vpop.permute.xlu0 %1923
    %1925 = vrot.lane.b32.xlu0 %v1893, 124
    %v1926 = vpop.permute.xlu0 %1925
    %1927 = vrot.lane.b32.xlu0 %v1898, 124
    %v1928 = vpop.permute.xlu0 %1927
    %v1933 = vadd.f32 %v1917, %v1922
    %v1934 = vadd.f32 %v1918, %v1924
    %v1935 = vadd.f32 %v1919, %v1926
    %v1936 = vadd.f32 %v1920, %v1928
    %v1937 = vxor.u32 %v1933, 2147483648
    %v1938 = vxor.u32 %v1934, 2147483648
    %v1939 = vxor.u32 %v1935, 2147483648
    %v1940 = vxor.u32 %v1936, 2147483648
    %v1941 = vmul.f32 %v1937, 1.442695
    %v1942 = vpow.pop %v1941
    %v1943 = vmul.f32 %v1938, 1.442695
    %v1944 = vpow.pop %v1943
    %v1945 = vmul.f32 %v1939, 1.442695
    %v1946 = vpow.pop %v1945
    %v1947 = vmul.f32 %v1940, 1.442695
    %v1948 = vpow.pop %v1947
    %v1949 = vadd.f32 %v1942, 1.0
    %v1950 = vadd.f32 %v1944, 1.0
    %v1951 = vadd.f32 %v1946, 1.0
    %v1952 = vadd.f32 %v1948, 1.0
    %v1953 = vrcp.pop %v1949
    %v1954 = vmul.f32 1.0, %v1953
    %v1955 = vrcp.pop %v1950
    %v1956 = vmul.f32 1.0, %v1955
    %v1957 = vrcp.pop %v1951
    %v1958 = vmul.f32 1.0, %v1957
    %v1959 = vrcp.pop %v1952
    %v1960 = vmul.f32 1.0, %v1959
    %1961 = vst.msk [vmem:[%s4] sm:$0xff] %vm1695, %v1954
    %1962 = vst.msk [vmem:[%s4 + $0x8] sm:$0xff] %vm1695, %v1956
    %1963 = vst.msk [vmem:[%s4 + $0x10] sm:$0xff] %vm1695, %v1958
    %1964 = vst.msk [vmem:[%s4 + $0x18] sm:$0xff] %vm1695, %v1960
    %1969 = vrot.lane.b32.xlu0 %v1954, 127
    %v1970 = vpop.permute.xlu0 %1969
    %1971 = vrot.lane.b32.xlu0 %v1956, 127
    %v1972 = vpop.permute.xlu0 %1971
    %1973 = vrot.lane.b32.xlu0 %v1958, 127
    %v1974 = vpop.permute.xlu0 %1973
    %1975 = vrot.lane.b32.xlu0 %v1960, 127
    %v1976 = vpop.permute.xlu0 %1975
    %s1981 = scalar_lea.vmem %s4, 32
    %1982 = vst.msk [vmem:[%s1981] sm:$0xff] %vm1695, %v1970
    %1983 = vst.msk [vmem:[%s1981 + $0x8] sm:$0xff] %vm1695, %v1972
    %1984 = vst.msk [vmem:[%s1981 + $0x10] sm:$0xff] %vm1695, %v1974
    %1985 = vst.msk [vmem:[%s1981 + $0x18] sm:$0xff] %vm1695, %v1976
    // Predicated region
    $region26: #{tpu_custom_call.1} parent=1 // pred_check
      _
    $region27: #{tpu_custom_call.1} parent=1 // pred_check_branch
      %1987 = sbr.rel (0) target = $region29
    $region28: #{tpu_custom_call.1} parent=1 // pred_region
      _
    $region29: #{tpu_custom_call.1} parent=1 // pred_fallthru
      _
    // Predicated region
    $region30: #{tpu_custom_call.1} parent=1 // pred_check
      _
    $region31: #{tpu_custom_call.1} parent=1 // pred_check_branch
      %1989 = sbr.rel (0) target = $region33
    $region32: #{tpu_custom_call.1} parent=1 // pred_region
      _
    $region33: #{tpu_custom_call.1} parent=1 // pred_fallthru
      _
    %1990 = vsyncpa [#allocation3], 1
    %1991 = vsyncpa [#allocation5], 1

</llo_original>
